<compile_context>
chip_gen: v7x
topology: tpu7x:2x2x1
jax: 0.10.0
libtpu: 0.0.40
codegen_flags: <defaults>
</compile_context>

<pallas_src>
import functools

import jax
import jax.numpy as jnp
from jax.experimental import pallas as pl
from jax.experimental.pallas import tpu as pltpu


# ----------------------------------------------------------------------------
# Fused kernel: separable upsample+pad -> conv1(im2col)+BN+ReLU
#                                       -> conv2(im2col)+BN+ReLU
# ----------------------------------------------------------------------------
def _up_bottle_kernel(x1_ref, x2f_ref, mxb_ref, myb_ref, w1_ref, b1_ref,
                      w2_ref, b2_ref, cm_ref, o_ref,
                      x1f_ref, slab1_ref, hfrm_ref, slab2_ref,
                      *, W, M, HW):
    """Per-batch-element fused Up_bottle forward (channel-major, flat spatial).

    Flat frames: true pixel p lives at index p + M, halo (M = W+1 columns each
    side) is zero, tail padded to a 128-multiple.  A 3x3 tap (dy, dx) of output
    position p reads frame index  M + p + dy*W + dx ; row overrun lands in the
    zero halo, column wrap-around is cancelled by the dx=+-1 masks baked into
    the im2col slab.

    x1_ref  : (1, C1, H1, W1)    low-res input
    x2f_ref : (1, C2, Linp)      skip input embedded in its zero-halo frame
    mxb_ref : (C1, W1, W)        width-interp operator (pre-broadcast over C1)
    myb_ref : (C1, H, H1)        height-interp operator (pre-broadcast over C1)
    w1_ref  : (Cmid, 9*(C2+C1))  conv1, im2col-fused, BN1 scale folded in
    b1_ref  : (Cmid, 1)          folded BN1 bias (f32)
    w2_ref  : (Cout, 9*Cmid)     conv2, im2col-fused, BN2 scale folded in
    b2_ref  : (Cout, 1)          folded BN2 bias (f32)
    cm_ref  : (2, HW)            column-wrap masks for dx = -1 / +1
    o_ref   : (1, Cout, HW)      output (NCHW with HW flattened, lane dense)
    scratch : x1f (C1,Linp), slab1 (9*Ct,HW), hfrm (Cmid,Linp), slab2 (9*Cmid,HW)
    """
    C1 = x1_ref.shape[1]
    C2 = x2f_ref.shape[1]
    Ct = C1 + C2
    Cmid = w1_ref.shape[0]
    Linp = x2f_ref.shape[2]
    H = HW // W
    f32 = jnp.float32
    cdt = slab1_ref.dtype

    # ---- bilinear x2 upsample + F.pad, separable (two small batched matmuls) ----
    xw = jax.lax.dot_general(                              # (C1, H1, W)
        x1_ref[0], mxb_ref[...],
        dimension_numbers=(((2,), (1,)), ((0,), (0,))),
        preferred_element_type=f32)
    x1u = jax.lax.dot_general(                             # (C1, H, W)
        myb_ref[...], xw.astype(cdt),
        dimension_numbers=(((2,), (1,)), ((0,), (0,))),
        preferred_element_type=f32)

    # embed up(x1) into its zero-halo flat frame (row-wise static stores; no
    # in-kernel reshape/transpose needed).
    x1f_ref[:, :M] = jnp.zeros((C1, M), cdt)
    x1f_ref[:, M + HW:] = jnp.zeros((C1, Linp - M - HW), cdt)
    x1u_c = x1u.astype(cdt)
    for y in range(H):
        x1f_ref[:, M + y * W:M + (y + 1) * W] = x1u_c[:, y, :]

    # ---- conv1 over concat([x2, up(x1)]): build im2col slab, ONE matmul ----
    cm_neg = cm_ref[0:1, :]                                # (1, HW): dx = -1
    cm_pos = cm_ref[1:2, :]                                # (1, HW): dx = +1
    taps = [(dy, dx) for dy in (-1, 0, 1) for dx in (-1, 0, 1)]

    for k, (dy, dx) in enumerate(taps):
        s = M + dy * W + dx                                # static frame offset
        a2 = x2f_ref[0, :, s:s + HW]
        a1 = x1f_ref[:, s:s + HW]
        if dx == -1:
            a2 = a2 * cm_neg
            a1 = a1 * cm_neg
        elif dx == 1:
            a2 = a2 * cm_pos
            a1 = a1 * cm_pos
        r = k * Ct
        slab1_ref[r:r + C2, :] = a2.astype(slab1_ref.dtype)
        slab1_ref[r + C2:r + Ct, :] = a1.astype(slab1_ref.dtype)

    h = jnp.dot(w1_ref[...], slab1_ref[...], preferred_element_type=f32)
    h = jnp.maximum(h + b1_ref[...], 0.0)                  # BN1 bias + ReLU (f32)

    # conv1 output into its own zero-halo frame (zero halo == SAME padding for
    # conv2; only true positions were computed, so no interior mask needed).
    hfrm_ref[:, :M] = jnp.zeros((Cmid, M), hfrm_ref.dtype)
    hfrm_ref[:, M + HW:] = jnp.zeros((Cmid, Linp - M - HW), hfrm_ref.dtype)
    hfrm_ref[:, M:M + HW] = h.astype(hfrm_ref.dtype)

    # ---- conv2: same im2col trick, ONE matmul, bias + ReLU ----
    for k, (dy, dx) in enumerate(taps):
        s = M + dy * W + dx
        a = hfrm_ref[:, s:s + HW]
        if dx == -1:
            a = a * cm_neg
        elif dx == 1:
            a = a * cm_pos
        slab2_ref[k * Cmid:(k + 1) * Cmid, :] = a.astype(slab2_ref.dtype)

    y2 = jnp.dot(w2_ref[...], slab2_ref[...], preferred_element_type=f32)
    o_ref[0] = jnp.maximum(y2 + b2_ref[...], 0.0).astype(o_ref.dtype)


# ----------------------------------------------------------------------------
# Wrapper: constant-operator folding + pallas_call
# ----------------------------------------------------------------------------
def _interp_matrix(out_size, in_size):
    """(out, in) matrix of 1-D bilinear interpolation, align_corners=True."""
    if in_size == 1:
        return jnp.ones((out_size, 1), jnp.float32)
    src = jnp.arange(out_size, dtype=jnp.float32) * (in_size - 1) / (out_size - 1)
    lo = jnp.clip(jnp.floor(src).astype(jnp.int32), 0, in_size - 2)
    frac = src - lo.astype(jnp.float32)
    rows = jnp.arange(out_size)
    m = jnp.zeros((out_size, in_size), jnp.float32)
    m = m.at[rows, lo].add(1.0 - frac)
    m = m.at[rows, lo + 1].add(frac)
    return m


def fold_bn(gamma, beta, mean, var, eps=1e-5):
    scale = gamma / jnp.sqrt(var + eps)
    return scale, beta - mean * scale


def up_bottle_forward(params, x1_nchw, x2_nchw, *, compute_dtype=jnp.bfloat16):
    """Up_bottle (bilinear=True) forward; inputs/output NCHW float32."""
    N, C1, H1, W1 = x1_nchw.shape
    _, C2, H, W = x2_nchw.shape
    Ct = C1 + C2
    HW = H * W
    M = W + 1                               # flat-frame halo (one row + one col)
    Lin = HW + 2 * M                        # frame length actually addressed
    Linp = -(-Lin // 128) * 128             # lane-pad frames to a 128 multiple

    Cmid = params['w1'].shape[0]
    Cout = params['w2'].shape[0]
    f32 = jnp.float32
    cdt = compute_dtype
    itemsize = jnp.dtype(cdt).itemsize

    # --- constant operators (shape/param-only; folded once in the wrapper) ---
    # Separable bilinear x2 (align_corners=True) + F.pad, pre-broadcast over C1
    # so the in-kernel interp is two plain batched matmuls (no dense kron).
    my = _interp_matrix(2 * H1, H1)
    mx = _interp_matrix(2 * W1, W1)
    dY, dX = H - 2 * H1, W - 2 * W1
    my_p = jnp.zeros((H, H1), f32).at[dY // 2:dY // 2 + 2 * H1, :].set(my)
    mx_p = jnp.zeros((W, W1), f32).at[dX // 2:dX // 2 + 2 * W1, :].set(mx)
    mxb = jnp.broadcast_to(mx_p.T[None], (C1, W1, W)).astype(cdt)
    myb = jnp.broadcast_to(my_p[None], (C1, H, H1)).astype(cdt)

    # BatchNorm (inference mode) folded: scale into weights, bias kept aside.
    s1, b1 = fold_bn(params['g1'], params['be1'], params['rm1'], params['rv1'])
    s2, b2 = fold_bn(params['g2'], params['be2'], params['rm2'], params['rv2'])
    w1 = params['w1'].astype(f32) * s1[:, None, None, None]       # (Cmid,Ct,3,3)
    w2 = params['w2'].astype(f32) * s2[:, None, None, None]       # (Cout,Cmid,3,3)
    # im2col-fused layout: [o, tap k = (dy+1)*3+(dx+1), concat channel c]
    w1_f = jnp.transpose(w1, (0, 2, 3, 1)).reshape(Cmid, 9 * Ct).astype(cdt)
    w2_f = jnp.transpose(w2, (0, 2, 3, 1)).reshape(Cout, 9 * Cmid).astype(cdt)
    b1c = b1.astype(f32).reshape(Cmid, 1)
    b2c = b2.astype(f32).reshape(Cout, 1)

    # Column-wrap masks for dx = -1 / +1 (shared by both convs).
    col = jnp.arange(HW) % W
    cm = jnp.stack([col >= 1, col <= W - 2]).astype(cdt)           # (2, HW)

    # Activations: x2 embedded in its zero-halo flat frame; x1 stays (C1,H1,W1).
    x2f = jnp.zeros((N, C2, Linp), cdt).at[:, :, M:M + HW].set(
        x2_nchw.reshape(N, C2, HW).astype(cdt))
    x1c = x1_nchw.astype(cdt)

    # --- cost estimate + explicit VMEM budget (double-buffering counted) ---
    flops = 2 * N * (C1 * H1 * W1 * W + C1 * H1 * H * W
                     + Cmid * 9 * Ct * HW + Cout * 9 * Cmid * HW)
    in_arrays = (x1c, x2f, mxb, myb, w1_f, b1c, w2_f, b2c, cm)
    bytes_accessed = sum(int(a.size) * a.dtype.itemsize for a in in_arrays) \
        + N * Cout * HW * 4
    cost = pl.CostEstimate(flops=flops, transcendentals=0,
                           bytes_accessed=bytes_accessed)

    scratch_bytes = (C1 * Linp + 9 * Ct * HW + Cmid * Linp
                     + 9 * Cmid * HW) * itemsize
    per_step_in = (C1 * H1 * W1 + C2 * Linp) * itemsize \
        + sum(int(a.size) * a.dtype.itemsize
              for a in (mxb, myb, w1_f, b1c, w2_f, b2c, cm))
    vmem_need = 2 * (per_step_in + Cout * HW * 4) + scratch_bytes + (8 << 20)
    vmem_limit = int(min(max(vmem_need, 32 << 20), 100 << 20))

    kernel = functools.partial(_up_bottle_kernel, W=W, M=M, HW=HW)
    out_flat = pl.pallas_call(
        kernel,
        out_shape=jax.ShapeDtypeStruct((N, Cout, HW), f32),
        grid=(N,),
        in_specs=[
            pl.BlockSpec((1, C1, H1, W1), lambda n: (n, 0, 0, 0)),
            pl.BlockSpec((1, C2, Linp), lambda n: (n, 0, 0)),
            pl.BlockSpec((C1, W1, W), lambda n: (0, 0, 0)),
            pl.BlockSpec((C1, H, H1), lambda n: (0, 0, 0)),
            pl.BlockSpec((Cmid, 9 * Ct), lambda n: (0, 0)),
            pl.BlockSpec((Cmid, 1), lambda n: (0, 0)),
            pl.BlockSpec((Cout, 9 * Cmid), lambda n: (0, 0)),
            pl.BlockSpec((Cout, 1), lambda n: (0, 0)),
            pl.BlockSpec((2, HW), lambda n: (0, 0)),
        ],
        out_specs=pl.BlockSpec((1, Cout, HW), lambda n: (n, 0, 0)),
        scratch_shapes=[
            pltpu.VMEM((C1, Linp), cdt),        # up(x1) flat frame
            pltpu.VMEM((9 * Ct, HW), cdt),      # conv1 im2col slab
            pltpu.VMEM((Cmid, Linp), cdt),      # conv1 output flat frame
            pltpu.VMEM((9 * Cmid, HW), cdt),    # conv2 im2col slab
        ],
        compiler_params=pltpu.CompilerParams(
            dimension_semantics=("parallel",),
            vmem_limit_bytes=vmem_limit),
        cost_estimate=cost,
    )(x1c, x2f, mxb, myb, w1_f, b1c, w2_f, b2c, cm)

    # TODO(synk): for real U-Net sizes (e.g. C=512, 64x64) add an H-row-strip
    # grid axis (halo'd strips via manual DMA or wrapper-side overlapping strip
    # copies) so double-buffered frames/slabs fit v7x's 64 MiB VMEM.
    return out_flat.reshape(N, Cout, H, W)


# ----------------------------------------------------------------------------
# Pure-JAX reference (independent code path) for correctness checking
# ----------------------------------------------------------------------------
def _conv_nchw(x, w):
    return jax.lax.conv_general_dilated(
        x, w, window_strides=(1, 1), padding='SAME',
        dimension_numbers=('NCHW', 'OIHW', 'NCHW'))


def up_bottle_reference(params, x1, x2):
    x1 = x1.astype(jnp.float32)
    x2 = x2.astype(jnp.float32)
    _, _, H1, W1 = x1.shape
    _, _, H, W = x2.shape
    my = _interp_matrix(2 * H1, H1)
    mx = _interp_matrix(2 * W1, W1)
    x1u = jnp.einsum('oh,nchw->ncow', my, x1)
    x1u = jnp.einsum('pw,ncow->ncop', mx, x1u)
    dY, dX = H - 2 * H1, W - 2 * W1
    x1u = jnp.pad(x1u, ((0, 0), (0, 0),
                        (dY // 2, dY - dY // 2), (dX // 2, dX - dX // 2)))
    x = jnp.concatenate([x2, x1u], axis=1)
    s1, b1 = fold_bn(params['g1'], params['be1'], params['rm1'], params['rv1'])
    s2, b2 = fold_bn(params['g2'], params['be2'], params['rm2'], params['rv2'])
    h = jnp.maximum(_conv_nchw(x, params['w1']) * s1[None, :, None, None]
                    + b1[None, :, None, None], 0.0)
    y = jnp.maximum(_conv_nchw(h, params['w2']) * s2[None, :, None, None]
                    + b2[None, :, None, None], 0.0)
    return y


# ----------------------------------------------------------------------------
# Deterministic parameter init + driver
# ----------------------------------------------------------------------------
def init_params(key, c_in, c_mid, c_out):
    ks = jax.random.split(key, 10)
    return {
        # conv weights kept in PyTorch OIHW layout
        'w1': 0.1 * jax.random.normal(ks[0], (c_mid, c_in, 3, 3), jnp.float32),
        'w2': 0.1 * jax.random.normal(ks[1], (c_out, c_mid, 3, 3), jnp.float32),
        # BatchNorm (inference): gamma, beta, running_mean, running_var
        'g1': 1.0 + 0.1 * jax.random.normal(ks[2], (c_mid,), jnp.float32),
        'be1': 0.1 * jax.random.normal(ks[3], (c_mid,), jnp.float32),
        'rm1': 0.1 * jax.random.normal(ks[4], (c_mid,), jnp.float32),
        'rv1': 1.0 + 0.1 * jnp.abs(jax.random.normal(ks[5], (c_mid,), jnp.float32)),
        'g2': 1.0 + 0.1 * jax.random.normal(ks[6], (c_out,), jnp.float32),
        'be2': 0.1 * jax.random.normal(ks[7], (c_out,), jnp.float32),
        'rm2': 0.1 * jax.random.normal(ks[8], (c_out,), jnp.float32),
        'rv2': 1.0 + 0.1 * jnp.abs(jax.random.normal(ks[9], (c_out,), jnp.float32)),
    }


if __name__ == "__main__":
    # Up_bottle(in_channels=8, mid_channels=<unused>, out_channels=4, bilinear=True)
    #   x1: (N, 4, 8, 8)  -> bilinear x2 -> (N, 4, 16, 16)
    #   x2: (N, 4, 16, 16) skip connection
    #   concat -> 8 channels (= in_channels); DoubleConv mid = 8 // 2 = 4, out = 4
    #   (out == mid so the module's BatchNorm2d(mid) after conv2 is well-defined)
    key = jax.random.PRNGKey(0)
    k1, k2, kp = jax.random.split(key, 3)

    N, C1, H1, W1 = 2, 4, 8, 8
    C2, H2, W2 = 4, 16, 16
    x1 = jax.random.normal(k1, (N, C1, H1, W1), jnp.float32)
    x2 = jax.random.normal(k2, (N, C2, H2, W2), jnp.float32)

    params = init_params(kp, c_in=C1 + C2, c_mid=(C1 + C2) // 2,
                         c_out=(C1 + C2) // 2)

    ref = jax.block_until_ready(up_bottle_reference(params, x1, x2))

    # exactness check: f32 compute path
    out_f32 = jax.block_until_ready(
        jax.jit(functools.partial(up_bottle_forward,
                                  compute_dtype=jnp.float32))(params, x1, x2))
    assert out_f32.shape == (N, (C1 + C2) // 2, H2, W2), out_f32.shape
    err32 = float(jnp.max(jnp.abs(out_f32 - ref)))
    assert jnp.allclose(out_f32, ref, rtol=2e-3, atol=2e-3), err32

    # performance configuration: bf16 operands, f32 MXU accumulation
    out_bf16 = jax.block_until_ready(jax.jit(up_bottle_forward)(params, x1, x2))
    rel = float(jnp.max(jnp.abs(out_bf16 - ref))
                / (float(jnp.max(jnp.abs(ref))) + 1e-6))
    assert rel < 8e-2, rel

    print("KERNEL_OK")
</pallas_src>

<mosaic_0001>
module attributes {stable_mosaic.version = 11 : i64} {
  func.func private @main(%arg0: i32) attributes {dimension_semantics = [#tpu.dimension_semantics<core_parallel>], iteration_bounds = array<i64: 2>, tpu.core_type = #tpu.core_type<sc_scalar_subcore>, window_params = []} {
    return
  }
}

module attributes {stable_mosaic.version = 11 : i64} {
  func.func private @main(%arg0: i32) attributes {dimension_semantics = [#tpu.dimension_semantics<core_parallel>], iteration_bounds = array<i64: 2>, tpu.core_type = #tpu.core_type<sc_scalar_subcore>, window_params = []} {
    return
  }
}

module attributes {stable_mosaic.version = 11 : i64} {
  func.func @_up_bottle_kernel(%arg0: i32, %arg1: memref<1x4x8x8xf32, #tpu.memory_space<vmem>>, %arg2: memref<1x4x384xf32, #tpu.memory_space<vmem>>, %arg3: memref<4x8x16xf32, #tpu.memory_space<vmem>>, %arg4: memref<4x16x8xf32, #tpu.memory_space<vmem>>, %arg5: memref<4x72xf32, #tpu.memory_space<vmem>>, %arg6: memref<4x1xf32, #tpu.memory_space<vmem>>, %arg7: memref<4x36xf32, #tpu.memory_space<vmem>>, %arg8: memref<4x1xf32, #tpu.memory_space<vmem>>, %arg9: memref<2x256xf32, #tpu.memory_space<vmem>>, %arg10: memref<1x4x256xf32, #tpu.memory_space<vmem>>, %arg11: memref<4x384xf32, #tpu.memory_space<vmem>>, %arg12: memref<72x256xf32, #tpu.memory_space<vmem>>, %arg13: memref<4x384xf32, #tpu.memory_space<vmem>>, %arg14: memref<36x256xf32, #tpu.memory_space<vmem>>) attributes {dimension_semantics = [#tpu.dimension_semantics<parallel>], iteration_bounds = array<i64: 2>, scalar_prefetch = 0 : i64, scratch_operands = 4 : i64, tpu.core_type = #tpu.core_type<tc>, window_params = [{transform_indices = @transform_0, window_bounds = array<i64: 1, 4, 8, 8>}, {transform_indices = @transform_1, window_bounds = array<i64: 1, 4, 384>}, {pipeline_mode = #tpu.pipeline_mode<synchronous>, transform_indices = @transform_2, window_bounds = array<i64: 4, 8, 16>}, {pipeline_mode = #tpu.pipeline_mode<synchronous>, transform_indices = @transform_3, window_bounds = array<i64: 4, 16, 8>}, {pipeline_mode = #tpu.pipeline_mode<synchronous>, transform_indices = @transform_4, window_bounds = array<i64: 4, 72>}, {pipeline_mode = #tpu.pipeline_mode<synchronous>, transform_indices = @transform_5, window_bounds = array<i64: 4, 1>}, {pipeline_mode = #tpu.pipeline_mode<synchronous>, transform_indices = @transform_6, window_bounds = array<i64: 4, 36>}, {pipeline_mode = #tpu.pipeline_mode<synchronous>, transform_indices = @transform_7, window_bounds = array<i64: 4, 1>}, {pipeline_mode = #tpu.pipeline_mode<synchronous>, transform_indices = @transform_8, window_bounds = array<i64: 2, 256>}, {transform_indices = @transform_9, window_bounds = array<i64: 1, 4, 256>}]} {
    %c0 = arith.constant 0 : index
    %c0_0 = arith.constant 0 : index
    %c0_1 = arith.constant 0 : index
    %c0_2 = arith.constant 0 : index
    %0 = vector.load %arg1[%c0, %c0_0, %c0_1, %c0_2] : memref<1x4x8x8xf32, #tpu.memory_space<vmem>>, vector<1x4x8x8xf32>
    %1 = vector.shape_cast %0 : vector<1x4x8x8xf32> to vector<4x8x8xf32>
    %c0_3 = arith.constant 0 : index
    %c0_4 = arith.constant 0 : index
    %c0_5 = arith.constant 0 : index
    %2 = vector.load %arg3[%c0_3, %c0_4, %c0_5] : memref<4x8x16xf32, #tpu.memory_space<vmem>>, vector<4x8x16xf32>
    %cst = arith.constant dense<0.000000e+00> : vector<4x8x16xf32>
    %3 = tpu.matmul %1, %2, %cst {dimension_numbers = #tpu.dot_dimension_numbers<[2], [1], [1], [2], [0, 0, 0, 1, 1, 2], [0], [0]>} : vector<4x8x8xf32>, vector<4x8x16xf32>, vector<4x8x16xf32> -> vector<4x8x16xf32>
    %c0_6 = arith.constant 0 : index
    %c0_7 = arith.constant 0 : index
    %c0_8 = arith.constant 0 : index
    %4 = vector.load %arg4[%c0_6, %c0_7, %c0_8] : memref<4x16x8xf32, #tpu.memory_space<vmem>>, vector<4x16x8xf32>
    %cst_9 = arith.constant dense<0.000000e+00> : vector<4x16x16xf32>
    %5 = tpu.matmul %4, %3, %cst_9 {dimension_numbers = #tpu.dot_dimension_numbers<[2], [1], [1], [2], [0, 0, 0, 1, 1, 2], [0], [0]>} : vector<4x16x8xf32>, vector<4x8x16xf32>, vector<4x16x16xf32> -> vector<4x16x16xf32>
    %cst_10 = arith.constant 0.000000e+00 : f32
    %6 = vector.broadcast %cst_10 : f32 to vector<4x17xf32>
    %c0_11 = arith.constant 0 : index
    %c0_12 = arith.constant 0 : index
    %7 = vector.load %arg11[%c0_11, %c0_12] : memref<4x384xf32, #tpu.memory_space<vmem>>, vector<4x17xf32>
    tpu.vector_store %arg11[%c0_11, %c0_12], %6 {strides = array<i32>} : memref<4x384xf32, #tpu.memory_space<vmem>>, vector<4x17xf32>,
    %cst_13 = arith.constant 0.000000e+00 : f32
    %8 = vector.broadcast %cst_13 : f32 to vector<4x111xf32>
    %c0_14 = arith.constant 0 : index
    %c273 = arith.constant 273 : index
    %9 = vector.load %arg11[%c0_14, %c273] : memref<4x384xf32, #tpu.memory_space<vmem>>, vector<4x111xf32>
    tpu.vector_store %arg11[%c0_14, %c273], %8 {strides = array<i32>} : memref<4x384xf32, #tpu.memory_space<vmem>>, vector<4x111xf32>,
    %10 = vector.extract_strided_slice %5 {offsets = [0, 0, 0], sizes = [4, 1, 16], strides = [1, 1, 1]} : vector<4x16x16xf32> to vector<4x1x16xf32>
    %11 = vector.shape_cast %10 : vector<4x1x16xf32> to vector<4x16xf32>
    %c0_15 = arith.constant 0 : index
    %c17 = arith.constant 17 : index
    %12 = vector.load %arg11[%c0_15, %c17] : memref<4x384xf32, #tpu.memory_space<vmem>>, vector<4x16xf32>
    tpu.vector_store %arg11[%c0_15, %c17], %11 {strides = array<i32>} : memref<4x384xf32, #tpu.memory_space<vmem>>, vector<4x16xf32>,
    %13 = vector.extract_strided_slice %5 {offsets = [0, 1, 0], sizes = [4, 1, 16], strides = [1, 1, 1]} : vector<4x16x16xf32> to vector<4x1x16xf32>
    %14 = vector.shape_cast %13 : vector<4x1x16xf32> to vector<4x16xf32>
    %c0_16 = arith.constant 0 : index
    %c33 = arith.constant 33 : index
    %15 = vector.load %arg11[%c0_16, %c33] : memref<4x384xf32, #tpu.memory_space<vmem>>, vector<4x16xf32>
    tpu.vector_store %arg11[%c0_16, %c33], %14 {strides = array<i32>} : memref<4x384xf32, #tpu.memory_space<vmem>>, vector<4x16xf32>,
    %16 = vector.extract_strided_slice %5 {offsets = [0, 2, 0], sizes = [4, 1, 16], strides = [1, 1, 1]} : vector<4x16x16xf32> to vector<4x1x16xf32>
    %17 = vector.shape_cast %16 : vector<4x1x16xf32> to vector<4x16xf32>
    %c0_17 = arith.constant 0 : index
    %c49 = arith.constant 49 : index
    %18 = vector.load %arg11[%c0_17, %c49] : memref<4x384xf32, #tpu.memory_space<vmem>>, vector<4x16xf32>
    tpu.vector_store %arg11[%c0_17, %c49], %17 {strides = array<i32>} : memref<4x384xf32, #tpu.memory_space<vmem>>, vector<4x16xf32>,
    %19 = vector.extract_strided_slice %5 {offsets = [0, 3, 0], sizes = [4, 1, 16], strides = [1, 1, 1]} : vector<4x16x16xf32> to vector<4x1x16xf32>
    %20 = vector.shape_cast %19 : vector<4x1x16xf32> to vector<4x16xf32>
    %c0_18 = arith.constant 0 : index
    %c65 = arith.constant 65 : index
    %21 = vector.load %arg11[%c0_18, %c65] : memref<4x384xf32, #tpu.memory_space<vmem>>, vector<4x16xf32>
    tpu.vector_store %arg11[%c0_18, %c65], %20 {strides = array<i32>} : memref<4x384xf32, #tpu.memory_space<vmem>>, vector<4x16xf32>,
    %22 = vector.extract_strided_slice %5 {offsets = [0, 4, 0], sizes = [4, 1, 16], strides = [1, 1, 1]} : vector<4x16x16xf32> to vector<4x1x16xf32>
    %23 = vector.shape_cast %22 : vector<4x1x16xf32> to vector<4x16xf32>
    %c0_19 = arith.constant 0 : index
    %c81 = arith.constant 81 : index
    %24 = vector.load %arg11[%c0_19, %c81] : memref<4x384xf32, #tpu.memory_space<vmem>>, vector<4x16xf32>
    tpu.vector_store %arg11[%c0_19, %c81], %23 {strides = array<i32>} : memref<4x384xf32, #tpu.memory_space<vmem>>, vector<4x16xf32>,
    %25 = vector.extract_strided_slice %5 {offsets = [0, 5, 0], sizes = [4, 1, 16], strides = [1, 1, 1]} : vector<4x16x16xf32> to vector<4x1x16xf32>
    %26 = vector.shape_cast %25 : vector<4x1x16xf32> to vector<4x16xf32>
    %c0_20 = arith.constant 0 : index
    %c97 = arith.constant 97 : index
    %27 = vector.load %arg11[%c0_20, %c97] : memref<4x384xf32, #tpu.memory_space<vmem>>, vector<4x16xf32>
    tpu.vector_store %arg11[%c0_20, %c97], %26 {strides = array<i32>} : memref<4x384xf32, #tpu.memory_space<vmem>>, vector<4x16xf32>,
    %28 = vector.extract_strided_slice %5 {offsets = [0, 6, 0], sizes = [4, 1, 16], strides = [1, 1, 1]} : vector<4x16x16xf32> to vector<4x1x16xf32>
    %29 = vector.shape_cast %28 : vector<4x1x16xf32> to vector<4x16xf32>
    %c0_21 = arith.constant 0 : index
    %c113 = arith.constant 113 : index
    %30 = vector.load %arg11[%c0_21, %c113] : memref<4x384xf32, #tpu.memory_space<vmem>>, vector<4x16xf32>
    tpu.vector_store %arg11[%c0_21, %c113], %29 {strides = array<i32>} : memref<4x384xf32, #tpu.memory_space<vmem>>, vector<4x16xf32>,
    %31 = vector.extract_strided_slice %5 {offsets = [0, 7, 0], sizes = [4, 1, 16], strides = [1, 1, 1]} : vector<4x16x16xf32> to vector<4x1x16xf32>
    %32 = vector.shape_cast %31 : vector<4x1x16xf32> to vector<4x16xf32>
    %c0_22 = arith.constant 0 : index
    %c129 = arith.constant 129 : index
    %33 = vector.load %arg11[%c0_22, %c129] : memref<4x384xf32, #tpu.memory_space<vmem>>, vector<4x16xf32>
    tpu.vector_store %arg11[%c0_22, %c129], %32 {strides = array<i32>} : memref<4x384xf32, #tpu.memory_space<vmem>>, vector<4x16xf32>,
    %34 = vector.extract_strided_slice %5 {offsets = [0, 8, 0], sizes = [4, 1, 16], strides = [1, 1, 1]} : vector<4x16x16xf32> to vector<4x1x16xf32>
    %35 = vector.shape_cast %34 : vector<4x1x16xf32> to vector<4x16xf32>
    %c0_23 = arith.constant 0 : index
    %c145 = arith.constant 145 : index
    %36 = vector.load %arg11[%c0_23, %c145] : memref<4x384xf32, #tpu.memory_space<vmem>>, vector<4x16xf32>
    tpu.vector_store %arg11[%c0_23, %c145], %35 {strides = array<i32>} : memref<4x384xf32, #tpu.memory_space<vmem>>, vector<4x16xf32>,
    %37 = vector.extract_strided_slice %5 {offsets = [0, 9, 0], sizes = [4, 1, 16], strides = [1, 1, 1]} : vector<4x16x16xf32> to vector<4x1x16xf32>
    %38 = vector.shape_cast %37 : vector<4x1x16xf32> to vector<4x16xf32>
    %c0_24 = arith.constant 0 : index
    %c161 = arith.constant 161 : index
    %39 = vector.load %arg11[%c0_24, %c161] : memref<4x384xf32, #tpu.memory_space<vmem>>, vector<4x16xf32>
    tpu.vector_store %arg11[%c0_24, %c161], %38 {strides = array<i32>} : memref<4x384xf32, #tpu.memory_space<vmem>>, vector<4x16xf32>,
    %40 = vector.extract_strided_slice %5 {offsets = [0, 10, 0], sizes = [4, 1, 16], strides = [1, 1, 1]} : vector<4x16x16xf32> to vector<4x1x16xf32>
    %41 = vector.shape_cast %40 : vector<4x1x16xf32> to vector<4x16xf32>
    %c0_25 = arith.constant 0 : index
    %c177 = arith.constant 177 : index
    %42 = vector.load %arg11[%c0_25, %c177] : memref<4x384xf32, #tpu.memory_space<vmem>>, vector<4x16xf32>
    tpu.vector_store %arg11[%c0_25, %c177], %41 {strides = array<i32>} : memref<4x384xf32, #tpu.memory_space<vmem>>, vector<4x16xf32>,
    %43 = vector.extract_strided_slice %5 {offsets = [0, 11, 0], sizes = [4, 1, 16], strides = [1, 1, 1]} : vector<4x16x16xf32> to vector<4x1x16xf32>
    %44 = vector.shape_cast %43 : vector<4x1x16xf32> to vector<4x16xf32>
    %c0_26 = arith.constant 0 : index
    %c193 = arith.constant 193 : index
    %45 = vector.load %arg11[%c0_26, %c193] : memref<4x384xf32, #tpu.memory_space<vmem>>, vector<4x16xf32>
    tpu.vector_store %arg11[%c0_26, %c193], %44 {strides = array<i32>} : memref<4x384xf32, #tpu.memory_space<vmem>>, vector<4x16xf32>,
    %46 = vector.extract_strided_slice %5 {offsets = [0, 12, 0], sizes = [4, 1, 16], strides = [1, 1, 1]} : vector<4x16x16xf32> to vector<4x1x16xf32>
    %47 = vector.shape_cast %46 : vector<4x1x16xf32> to vector<4x16xf32>
    %c0_27 = arith.constant 0 : index
    %c209 = arith.constant 209 : index
    %48 = vector.load %arg11[%c0_27, %c209] : memref<4x384xf32, #tpu.memory_space<vmem>>, vector<4x16xf32>
    tpu.vector_store %arg11[%c0_27, %c209], %47 {strides = array<i32>} : memref<4x384xf32, #tpu.memory_space<vmem>>, vector<4x16xf32>,
    %49 = vector.extract_strided_slice %5 {offsets = [0, 13, 0], sizes = [4, 1, 16], strides = [1, 1, 1]} : vector<4x16x16xf32> to vector<4x1x16xf32>
    %50 = vector.shape_cast %49 : vector<4x1x16xf32> to vector<4x16xf32>
    %c0_28 = arith.constant 0 : index
    %c225 = arith.constant 225 : index
    %51 = vector.load %arg11[%c0_28, %c225] : memref<4x384xf32, #tpu.memory_space<vmem>>, vector<4x16xf32>
    tpu.vector_store %arg11[%c0_28, %c225], %50 {strides = array<i32>} : memref<4x384xf32, #tpu.memory_space<vmem>>, vector<4x16xf32>,
    %52 = vector.extract_strided_slice %5 {offsets = [0, 14, 0], sizes = [4, 1, 16], strides = [1, 1, 1]} : vector<4x16x16xf32> to vector<4x1x16xf32>
    %53 = vector.shape_cast %52 : vector<4x1x16xf32> to vector<4x16xf32>
    %c0_29 = arith.constant 0 : index
    %c241 = arith.constant 241 : index
    %54 = vector.load %arg11[%c0_29, %c241] : memref<4x384xf32, #tpu.memory_space<vmem>>, vector<4x16xf32>
    tpu.vector_store %arg11[%c0_29, %c241], %53 {strides = array<i32>} : memref<4x384xf32, #tpu.memory_space<vmem>>, vector<4x16xf32>,
    %55 = vector.extract_strided_slice %5 {offsets = [0, 15, 0], sizes = [4, 1, 16], strides = [1, 1, 1]} : vector<4x16x16xf32> to vector<4x1x16xf32>
    %56 = vector.shape_cast %55 : vector<4x1x16xf32> to vector<4x16xf32>
    %c0_30 = arith.constant 0 : index
    %c257 = arith.constant 257 : index
    %57 = vector.load %arg11[%c0_30, %c257] : memref<4x384xf32, #tpu.memory_space<vmem>>, vector<4x16xf32>
    tpu.vector_store %arg11[%c0_30, %c257], %56 {strides = array<i32>} : memref<4x384xf32, #tpu.memory_space<vmem>>, vector<4x16xf32>,
    %c0_31 = arith.constant 0 : index
    %c0_32 = arith.constant 0 : index
    %58 = vector.load %arg9[%c0_31, %c0_32] : memref<2x256xf32, #tpu.memory_space<vmem>>, vector<1x256xf32>
    %c1 = arith.constant 1 : index
    %c0_33 = arith.constant 0 : index
    %59 = vector.load %arg9[%c1, %c0_33] : memref<2x256xf32, #tpu.memory_space<vmem>>, vector<1x256xf32>
    %c0_34 = arith.constant 0 : index
    %c0_35 = arith.constant 0 : index
    %c0_36 = arith.constant 0 : index
    %60 = vector.load %arg2[%c0_34, %c0_35, %c0_36] : memref<1x4x384xf32, #tpu.memory_space<vmem>>, vector<1x4x256xf32>
    %61 = vector.shape_cast %60 : vector<1x4x256xf32> to vector<4x256xf32>
    %c0_37 = arith.constant 0 : index
    %c0_38 = arith.constant 0 : index
    %62 = vector.load %arg11[%c0_37, %c0_38] : memref<4x384xf32, #tpu.memory_space<vmem>>, vector<4x256xf32>
    %63 = vector.broadcast %58 : vector<1x256xf32> to vector<4x256xf32>
    %64 = arith.mulf %61, %63 : vector<4x256xf32>
    %65 = vector.broadcast %58 : vector<1x256xf32> to vector<4x256xf32>
    %66 = arith.mulf %62, %65 : vector<4x256xf32>
    %c0_39 = arith.constant 0 : index
    %c0_40 = arith.constant 0 : index
    %67 = vector.load %arg12[%c0_39, %c0_40] : memref<72x256xf32, #tpu.memory_space<vmem>>, vector<4x256xf32>
    tpu.vector_store %arg12[%c0_39, %c0_40], %64 {strides = array<i32>} : memref<72x256xf32, #tpu.memory_space<vmem>>, vector<4x256xf32>,
    %c4 = arith.constant 4 : index
    %c0_41 = arith.constant 0 : index
    %68 = vector.load %arg12[%c4, %c0_41] : memref<72x256xf32, #tpu.memory_space<vmem>>, vector<4x256xf32>
    tpu.vector_store %arg12[%c4, %c0_41], %66 {strides = array<i32>} : memref<72x256xf32, #tpu.memory_space<vmem>>, vector<4x256xf32>,
    %c0_42 = arith.constant 0 : index
    %c0_43 = arith.constant 0 : index
    %c1_44 = arith.constant 1 : index
    %69 = vector.load %arg2[%c0_42, %c0_43, %c1_44] : memref<1x4x384xf32, #tpu.memory_space<vmem>>, vector<1x4x256xf32>
    %70 = vector.shape_cast %69 : vector<1x4x256xf32> to vector<4x256xf32>
    %c0_45 = arith.constant 0 : index
    %c1_46 = arith.constant 1 : index
    %71 = vector.load %arg11[%c0_45, %c1_46] : memref<4x384xf32, #tpu.memory_space<vmem>>, vector<4x256xf32>
    %c8 = arith.constant 8 : index
    %c0_47 = arith.constant 0 : index
    %72 = vector.load %arg12[%c8, %c0_47] : memref<72x256xf32, #tpu.memory_space<vmem>>, vector<4x256xf32>
    tpu.vector_store %arg12[%c8, %c0_47], %70 {strides = array<i32>} : memref<72x256xf32, #tpu.memory_space<vmem>>, vector<4x256xf32>,
    %c12 = arith.constant 12 : index
    %c0_48 = arith.constant 0 : index
    %73 = vector.load %arg12[%c12, %c0_48] : memref<72x256xf32, #tpu.memory_space<vmem>>, vector<4x256xf32>
    tpu.vector_store %arg12[%c12, %c0_48], %71 {strides = array<i32>} : memref<72x256xf32, #tpu.memory_space<vmem>>, vector<4x256xf32>,
    %c0_49 = arith.constant 0 : index
    %c0_50 = arith.constant 0 : index
    %c2 = arith.constant 2 : index
    %74 = vector.load %arg2[%c0_49, %c0_50, %c2] : memref<1x4x384xf32, #tpu.memory_space<vmem>>, vector<1x4x256xf32>
    %75 = vector.shape_cast %74 : vector<1x4x256xf32> to vector<4x256xf32>
    %c0_51 = arith.constant 0 : index
    %c2_52 = arith.constant 2 : index
    %76 = vector.load %arg11[%c0_51, %c2_52] : memref<4x384xf32, #tpu.memory_space<vmem>>, vector<4x256xf32>
    %77 = vector.broadcast %59 : vector<1x256xf32> to vector<4x256xf32>
    %78 = arith.mulf %75, %77 : vector<4x256xf32>
    %79 = vector.broadcast %59 : vector<1x256xf32> to vector<4x256xf32>
    %80 = arith.mulf %76, %79 : vector<4x256xf32>
    %c16 = arith.constant 16 : index
    %c0_53 = arith.constant 0 : index
    %81 = vector.load %arg12[%c16, %c0_53] : memref<72x256xf32, #tpu.memory_space<vmem>>, vector<4x256xf32>
    tpu.vector_store %arg12[%c16, %c0_53], %78 {strides = array<i32>} : memref<72x256xf32, #tpu.memory_space<vmem>>, vector<4x256xf32>,
    %c20 = arith.constant 20 : index
    %c0_54 = arith.constant 0 : index
    %82 = vector.load %arg12[%c20, %c0_54] : memref<72x256xf32, #tpu.memory_space<vmem>>, vector<4x256xf32>
    tpu.vector_store %arg12[%c20, %c0_54], %80 {strides = array<i32>} : memref<72x256xf32, #tpu.memory_space<vmem>>, vector<4x256xf32>,
    %c0_55 = arith.constant 0 : index
    %c0_56 = arith.constant 0 : index
    %c16_57 = arith.constant 16 : index
    %83 = vector.load %arg2[%c0_55, %c0_56, %c16_57] : memref<1x4x384xf32, #tpu.memory_space<vmem>>, vector<1x4x256xf32>
    %84 = vector.shape_cast %83 : vector<1x4x256xf32> to vector<4x256xf32>
    %c0_58 = arith.constant 0 : index
    %c16_59 = arith.constant 16 : index
    %85 = vector.load %arg11[%c0_58, %c16_59] : memref<4x384xf32, #tpu.memory_space<vmem>>, vector<4x256xf32>
    %86 = vector.broadcast %58 : vector<1x256xf32> to vector<4x256xf32>
    %87 = arith.mulf %84, %86 : vector<4x256xf32>
    %88 = vector.broadcast %58 : vector<1x256xf32> to vector<4x256xf32>
    %89 = arith.mulf %85, %88 : vector<4x256xf32>
    %c24 = arith.constant 24 : index
    %c0_60 = arith.constant 0 : index
    %90 = vector.load %arg12[%c24, %c0_60] : memref<72x256xf32, #tpu.memory_space<vmem>>, vector<4x256xf32>
    tpu.vector_store %arg12[%c24, %c0_60], %87 {strides = array<i32>} : memref<72x256xf32, #tpu.memory_space<vmem>>, vector<4x256xf32>,
    %c28 = arith.constant 28 : index
    %c0_61 = arith.constant 0 : index
    %91 = vector.load %arg12[%c28, %c0_61] : memref<72x256xf32, #tpu.memory_space<vmem>>, vector<4x256xf32>
    tpu.vector_store %arg12[%c28, %c0_61], %89 {strides = array<i32>} : memref<72x256xf32, #tpu.memory_space<vmem>>, vector<4x256xf32>,
    %c0_62 = arith.constant 0 : index
    %c0_63 = arith.constant 0 : index
    %c17_64 = arith.constant 17 : index
    %92 = vector.load %arg2[%c0_62, %c0_63, %c17_64] : memref<1x4x384xf32, #tpu.memory_space<vmem>>, vector<1x4x256xf32>
    %93 = vector.shape_cast %92 : vector<1x4x256xf32> to vector<4x256xf32>
    %c0_65 = arith.constant 0 : index
    %c17_66 = arith.constant 17 : index
    %94 = vector.load %arg11[%c0_65, %c17_66] : memref<4x384xf32, #tpu.memory_space<vmem>>, vector<4x256xf32>
    %c32 = arith.constant 32 : index
    %c0_67 = arith.constant 0 : index
    %95 = vector.load %arg12[%c32, %c0_67] : memref<72x256xf32, #tpu.memory_space<vmem>>, vector<4x256xf32>
    tpu.vector_store %arg12[%c32, %c0_67], %93 {strides = array<i32>} : memref<72x256xf32, #tpu.memory_space<vmem>>, vector<4x256xf32>,
    %c36 = arith.constant 36 : index
    %c0_68 = arith.constant 0 : index
    %96 = vector.load %arg12[%c36, %c0_68] : memref<72x256xf32, #tpu.memory_space<vmem>>, vector<4x256xf32>
    tpu.vector_store %arg12[%c36, %c0_68], %94 {strides = array<i32>} : memref<72x256xf32, #tpu.memory_space<vmem>>, vector<4x256xf32>,
    %c0_69 = arith.constant 0 : index
    %c0_70 = arith.constant 0 : index
    %c18 = arith.constant 18 : index
    %97 = vector.load %arg2[%c0_69, %c0_70, %c18] : memref<1x4x384xf32, #tpu.memory_space<vmem>>, vector<1x4x256xf32>
    %98 = vector.shape_cast %97 : vector<1x4x256xf32> to vector<4x256xf32>
    %c0_71 = arith.constant 0 : index
    %c18_72 = arith.constant 18 : index
    %99 = vector.load %arg11[%c0_71, %c18_72] : memref<4x384xf32, #tpu.memory_space<vmem>>, vector<4x256xf32>
    %100 = vector.broadcast %59 : vector<1x256xf32> to vector<4x256xf32>
    %101 = arith.mulf %98, %100 : vector<4x256xf32>
    %102 = vector.broadcast %59 : vector<1x256xf32> to vector<4x256xf32>
    %103 = arith.mulf %99, %102 : vector<4x256xf32>
    %c40 = arith.constant 40 : index
    %c0_73 = arith.constant 0 : index
    %104 = vector.load %arg12[%c40, %c0_73] : memref<72x256xf32, #tpu.memory_space<vmem>>, vector<4x256xf32>
    tpu.vector_store %arg12[%c40, %c0_73], %101 {strides = array<i32>} : memref<72x256xf32, #tpu.memory_space<vmem>>, vector<4x256xf32>,
    %c44 = arith.constant 44 : index
    %c0_74 = arith.constant 0 : index
    %105 = vector.load %arg12[%c44, %c0_74] : memref<72x256xf32, #tpu.memory_space<vmem>>, vector<4x256xf32>
    tpu.vector_store %arg12[%c44, %c0_74], %103 {strides = array<i32>} : memref<72x256xf32, #tpu.memory_space<vmem>>, vector<4x256xf32>,
    %c0_75 = arith.constant 0 : index
    %c0_76 = arith.constant 0 : index
    %c32_77 = arith.constant 32 : index
    %106 = vector.load %arg2[%c0_75, %c0_76, %c32_77] : memref<1x4x384xf32, #tpu.memory_space<vmem>>, vector<1x4x256xf32>
    %107 = vector.shape_cast %106 : vector<1x4x256xf32> to vector<4x256xf32>
    %c0_78 = arith.constant 0 : index
    %c32_79 = arith.constant 32 : index
    %108 = vector.load %arg11[%c0_78, %c32_79] : memref<4x384xf32, #tpu.memory_space<vmem>>, vector<4x256xf32>
    %109 = vector.broadcast %58 : vector<1x256xf32> to vector<4x256xf32>
    %110 = arith.mulf %107, %109 : vector<4x256xf32>
    %111 = vector.broadcast %58 : vector<1x256xf32> to vector<4x256xf32>
    %112 = arith.mulf %108, %111 : vector<4x256xf32>
    %c48 = arith.constant 48 : index
    %c0_80 = arith.constant 0 : index
    %113 = vector.load %arg12[%c48, %c0_80] : memref<72x256xf32, #tpu.memory_space<vmem>>, vector<4x256xf32>
    tpu.vector_store %arg12[%c48, %c0_80], %110 {strides = array<i32>} : memref<72x256xf32, #tpu.memory_space<vmem>>, vector<4x256xf32>,
    %c52 = arith.constant 52 : index
    %c0_81 = arith.constant 0 : index
    %114 = vector.load %arg12[%c52, %c0_81] : memref<72x256xf32, #tpu.memory_space<vmem>>, vector<4x256xf32>
    tpu.vector_store %arg12[%c52, %c0_81], %112 {strides = array<i32>} : memref<72x256xf32, #tpu.memory_space<vmem>>, vector<4x256xf32>,
    %c0_82 = arith.constant 0 : index
    %c0_83 = arith.constant 0 : index
    %c33_84 = arith.constant 33 : index
    %115 = vector.load %arg2[%c0_82, %c0_83, %c33_84] : memref<1x4x384xf32, #tpu.memory_space<vmem>>, vector<1x4x256xf32>
    %116 = vector.shape_cast %115 : vector<1x4x256xf32> to vector<4x256xf32>
    %c0_85 = arith.constant 0 : index
    %c33_86 = arith.constant 33 : index
    %117 = vector.load %arg11[%c0_85, %c33_86] : memref<4x384xf32, #tpu.memory_space<vmem>>, vector<4x256xf32>
    %c56 = arith.constant 56 : index
    %c0_87 = arith.constant 0 : index
    %118 = vector.load %arg12[%c56, %c0_87] : memref<72x256xf32, #tpu.memory_space<vmem>>, vector<4x256xf32>
    tpu.vector_store %arg12[%c56, %c0_87], %116 {strides = array<i32>} : memref<72x256xf32, #tpu.memory_space<vmem>>, vector<4x256xf32>,
    %c60 = arith.constant 60 : index
    %c0_88 = arith.constant 0 : index
    %119 = vector.load %arg12[%c60, %c0_88] : memref<72x256xf32, #tpu.memory_space<vmem>>, vector<4x256xf32>
    tpu.vector_store %arg12[%c60, %c0_88], %117 {strides = array<i32>} : memref<72x256xf32, #tpu.memory_space<vmem>>, vector<4x256xf32>,
    %c0_89 = arith.constant 0 : index
    %c0_90 = arith.constant 0 : index
    %c34 = arith.constant 34 : index
    %120 = vector.load %arg2[%c0_89, %c0_90, %c34] : memref<1x4x384xf32, #tpu.memory_space<vmem>>, vector<1x4x256xf32>
    %121 = vector.shape_cast %120 : vector<1x4x256xf32> to vector<4x256xf32>
    %c0_91 = arith.constant 0 : index
    %c34_92 = arith.constant 34 : index
    %122 = vector.load %arg11[%c0_91, %c34_92] : memref<4x384xf32, #tpu.memory_space<vmem>>, vector<4x256xf32>
    %123 = vector.broadcast %59 : vector<1x256xf32> to vector<4x256xf32>
    %124 = arith.mulf %121, %123 : vector<4x256xf32>
    %125 = vector.broadcast %59 : vector<1x256xf32> to vector<4x256xf32>
    %126 = arith.mulf %122, %125 : vector<4x256xf32>
    %c64 = arith.constant 64 : index
    %c0_93 = arith.constant 0 : index
    %127 = vector.load %arg12[%c64, %c0_93] : memref<72x256xf32, #tpu.memory_space<vmem>>, vector<4x256xf32>
    tpu.vector_store %arg12[%c64, %c0_93], %124 {strides = array<i32>} : memref<72x256xf32, #tpu.memory_space<vmem>>, vector<4x256xf32>,
    %c68 = arith.constant 68 : index
    %c0_94 = arith.constant 0 : index
    %128 = vector.load %arg12[%c68, %c0_94] : memref<72x256xf32, #tpu.memory_space<vmem>>, vector<4x256xf32>
    tpu.vector_store %arg12[%c68, %c0_94], %126 {strides = array<i32>} : memref<72x256xf32, #tpu.memory_space<vmem>>, vector<4x256xf32>,
    %c0_95 = arith.constant 0 : index
    %c0_96 = arith.constant 0 : index
    %129 = vector.load %arg5[%c0_95, %c0_96] : memref<4x72xf32, #tpu.memory_space<vmem>>, vector<4x72xf32>
    %c0_97 = arith.constant 0 : index
    %c0_98 = arith.constant 0 : index
    %130 = vector.load %arg12[%c0_97, %c0_98] : memref<72x256xf32, #tpu.memory_space<vmem>>, vector<72x256xf32>
    %cst_99 = arith.constant dense<0.000000e+00> : vector<4x256xf32>
    %131 = tpu.matmul %129, %130, %cst_99 {dimension_numbers = #tpu.dot_dimension_numbers<[1], [0], [0], [1], [0, 0, 1, 1], [], []>} : vector<4x72xf32>, vector<72x256xf32>, vector<4x256xf32> -> vector<4x256xf32>
    %c0_100 = arith.constant 0 : index
    %c0_101 = arith.constant 0 : index
    %132 = vector.load %arg6[%c0_100, %c0_101] : memref<4x1xf32, #tpu.memory_space<vmem>>, vector<4x1xf32>
    %133 = vector.broadcast %132 : vector<4x1xf32> to vector<4x256xf32>
    %134 = arith.addf %131, %133 : vector<4x256xf32>
    %cst_102 = arith.constant 0.000000e+00 : f32
    %135 = vector.broadcast %cst_102 : f32 to vector<4x256xf32>
    %136 = arith.maximumf %134, %135 : vector<4x256xf32>
    %cst_103 = arith.constant 0.000000e+00 : f32
    %137 = vector.broadcast %cst_103 : f32 to vector<4x17xf32>
    %c0_104 = arith.constant 0 : index
    %c0_105 = arith.constant 0 : index
    %138 = vector.load %arg13[%c0_104, %c0_105] : memref<4x384xf32, #tpu.memory_space<vmem>>, vector<4x17xf32>
    tpu.vector_store %arg13[%c0_104, %c0_105], %137 {strides = array<i32>} : memref<4x384xf32, #tpu.memory_space<vmem>>, vector<4x17xf32>,
    %cst_106 = arith.constant 0.000000e+00 : f32
    %139 = vector.broadcast %cst_106 : f32 to vector<4x111xf32>
    %c0_107 = arith.constant 0 : index
    %c273_108 = arith.constant 273 : index
    %140 = vector.load %arg13[%c0_107, %c273_108] : memref<4x384xf32, #tpu.memory_space<vmem>>, vector<4x111xf32>
    tpu.vector_store %arg13[%c0_107, %c273_108], %139 {strides = array<i32>} : memref<4x384xf32, #tpu.memory_space<vmem>>, vector<4x111xf32>,
    %c0_109 = arith.constant 0 : index
    %c17_110 = arith.constant 17 : index
    %141 = vector.load %arg13[%c0_109, %c17_110] : memref<4x384xf32, #tpu.memory_space<vmem>>, vector<4x256xf32>
    tpu.vector_store %arg13[%c0_109, %c17_110], %136 {strides = array<i32>} : memref<4x384xf32, #tpu.memory_space<vmem>>, vector<4x256xf32>,
    %c0_111 = arith.constant 0 : index
    %c0_112 = arith.constant 0 : index
    %142 = vector.load %arg13[%c0_111, %c0_112] : memref<4x384xf32, #tpu.memory_space<vmem>>, vector<4x256xf32>
    %143 = vector.broadcast %58 : vector<1x256xf32> to vector<4x256xf32>
    %144 = arith.mulf %142, %143 : vector<4x256xf32>
    %c0_113 = arith.constant 0 : index
    %c0_114 = arith.constant 0 : index
    %145 = vector.load %arg14[%c0_113, %c0_114] : memref<36x256xf32, #tpu.memory_space<vmem>>, vector<4x256xf32>
    tpu.vector_store %arg14[%c0_113, %c0_114], %144 {strides = array<i32>} : memref<36x256xf32, #tpu.memory_space<vmem>>, vector<4x256xf32>,
    %c0_115 = arith.constant 0 : index
    %c1_116 = arith.constant 1 : index
    %146 = vector.load %arg13[%c0_115, %c1_116] : memref<4x384xf32, #tpu.memory_space<vmem>>, vector<4x256xf32>
    %c4_117 = arith.constant 4 : index
    %c0_118 = arith.constant 0 : index
    %147 = vector.load %arg14[%c4_117, %c0_118] : memref<36x256xf32, #tpu.memory_space<vmem>>, vector<4x256xf32>
    tpu.vector_store %arg14[%c4_117, %c0_118], %146 {strides = array<i32>} : memref<36x256xf32, #tpu.memory_space<vmem>>, vector<4x256xf32>,
    %c0_119 = arith.constant 0 : index
    %c2_120 = arith.constant 2 : index
    %148 = vector.load %arg13[%c0_119, %c2_120] : memref<4x384xf32, #tpu.memory_space<vmem>>, vector<4x256xf32>
    %149 = vector.broadcast %59 : vector<1x256xf32> to vector<4x256xf32>
    %150 = arith.mulf %148, %149 : vector<4x256xf32>
    %c8_121 = arith.constant 8 : index
    %c0_122 = arith.constant 0 : index
    %151 = vector.load %arg14[%c8_121, %c0_122] : memref<36x256xf32, #tpu.memory_space<vmem>>, vector<4x256xf32>
    tpu.vector_store %arg14[%c8_121, %c0_122], %150 {strides = array<i32>} : memref<36x256xf32, #tpu.memory_space<vmem>>, vector<4x256xf32>,
    %c0_123 = arith.constant 0 : index
    %c16_124 = arith.constant 16 : index
    %152 = vector.load %arg13[%c0_123, %c16_124] : memref<4x384xf32, #tpu.memory_space<vmem>>, vector<4x256xf32>
    %153 = vector.broadcast %58 : vector<1x256xf32> to vector<4x256xf32>
    %154 = arith.mulf %152, %153 : vector<4x256xf32>
    %c12_125 = arith.constant 12 : index
    %c0_126 = arith.constant 0 : index
    %155 = vector.load %arg14[%c12_125, %c0_126] : memref<36x256xf32, #tpu.memory_space<vmem>>, vector<4x256xf32>
    tpu.vector_store %arg14[%c12_125, %c0_126], %154 {strides = array<i32>} : memref<36x256xf32, #tpu.memory_space<vmem>>, vector<4x256xf32>,
    %c0_127 = arith.constant 0 : index
    %c17_128 = arith.constant 17 : index
    %156 = vector.load %arg13[%c0_127, %c17_128] : memref<4x384xf32, #tpu.memory_space<vmem>>, vector<4x256xf32>
    %c16_129 = arith.constant 16 : index
    %c0_130 = arith.constant 0 : index
    %157 = vector.load %arg14[%c16_129, %c0_130] : memref<36x256xf32, #tpu.memory_space<vmem>>, vector<4x256xf32>
    tpu.vector_store %arg14[%c16_129, %c0_130], %156 {strides = array<i32>} : memref<36x256xf32, #tpu.memory_space<vmem>>, vector<4x256xf32>,
    %c0_131 = arith.constant 0 : index
    %c18_132 = arith.constant 18 : index
    %158 = vector.load %arg13[%c0_131, %c18_132] : memref<4x384xf32, #tpu.memory_space<vmem>>, vector<4x256xf32>
    %159 = vector.broadcast %59 : vector<1x256xf32> to vector<4x256xf32>
    %160 = arith.mulf %158, %159 : vector<4x256xf32>
    %c20_133 = arith.constant 20 : index
    %c0_134 = arith.constant 0 : index
    %161 = vector.load %arg14[%c20_133, %c0_134] : memref<36x256xf32, #tpu.memory_space<vmem>>, vector<4x256xf32>
    tpu.vector_store %arg14[%c20_133, %c0_134], %160 {strides = array<i32>} : memref<36x256xf32, #tpu.memory_space<vmem>>, vector<4x256xf32>,
    %c0_135 = arith.constant 0 : index
    %c32_136 = arith.constant 32 : index
    %162 = vector.load %arg13[%c0_135, %c32_136] : memref<4x384xf32, #tpu.memory_space<vmem>>, vector<4x256xf32>
    %163 = vector.broadcast %58 : vector<1x256xf32> to vector<4x256xf32>
    %164 = arith.mulf %162, %163 : vector<4x256xf32>
    %c24_137 = arith.constant 24 : index
    %c0_138 = arith.constant 0 : index
    %165 = vector.load %arg14[%c24_137, %c0_138] : memref<36x256xf32, #tpu.memory_space<vmem>>, vector<4x256xf32>
    tpu.vector_store %arg14[%c24_137, %c0_138], %164 {strides = array<i32>} : memref<36x256xf32, #tpu.memory_space<vmem>>, vector<4x256xf32>,
    %c0_139 = arith.constant 0 : index
    %c33_140 = arith.constant 33 : index
    %166 = vector.load %arg13[%c0_139, %c33_140] : memref<4x384xf32, #tpu.memory_space<vmem>>, vector<4x256xf32>
    %c28_141 = arith.constant 28 : index
    %c0_142 = arith.constant 0 : index
    %167 = vector.load %arg14[%c28_141, %c0_142] : memref<36x256xf32, #tpu.memory_space<vmem>>, vector<4x256xf32>
    tpu.vector_store %arg14[%c28_141, %c0_142], %166 {strides = array<i32>} : memref<36x256xf32, #tpu.memory_space<vmem>>, vector<4x256xf32>,
    %c0_143 = arith.constant 0 : index
    %c34_144 = arith.constant 34 : index
    %168 = vector.load %arg13[%c0_143, %c34_144] : memref<4x384xf32, #tpu.memory_space<vmem>>, vector<4x256xf32>
    %169 = vector.broadcast %59 : vector<1x256xf32> to vector<4x256xf32>
    %170 = arith.mulf %168, %169 : vector<4x256xf32>
    %c32_145 = arith.constant 32 : index
    %c0_146 = arith.constant 0 : index
    %171 = vector.load %arg14[%c32_145, %c0_146] : memref<36x256xf32, #tpu.memory_space<vmem>>, vector<4x256xf32>
    tpu.vector_store %arg14[%c32_145, %c0_146], %170 {strides = array<i32>} : memref<36x256xf32, #tpu.memory_space<vmem>>, vector<4x256xf32>,
    %c0_147 = arith.constant 0 : index
    %c0_148 = arith.constant 0 : index
    %172 = vector.load %arg7[%c0_147, %c0_148] : memref<4x36xf32, #tpu.memory_space<vmem>>, vector<4x36xf32>
    %c0_149 = arith.constant 0 : index
    %c0_150 = arith.constant 0 : index
    %173 = vector.load %arg14[%c0_149, %c0_150] : memref<36x256xf32, #tpu.memory_space<vmem>>, vector<36x256xf32>
    %cst_151 = arith.constant dense<0.000000e+00> : vector<4x256xf32>
    %174 = tpu.matmul %172, %173, %cst_151 {dimension_numbers = #tpu.dot_dimension_numbers<[1], [0], [0], [1], [0, 0, 1, 1], [], []>} : vector<4x36xf32>, vector<36x256xf32>, vector<4x256xf32> -> vector<4x256xf32>
    %c0_152 = arith.constant 0 : index
    %c0_153 = arith.constant 0 : index
    %175 = vector.load %arg8[%c0_152, %c0_153] : memref<4x1xf32, #tpu.memory_space<vmem>>, vector<4x1xf32>
    %176 = vector.broadcast %175 : vector<4x1xf32> to vector<4x256xf32>
    %177 = arith.addf %174, %176 : vector<4x256xf32>
    %cst_154 = arith.constant 0.000000e+00 : f32
    %178 = vector.broadcast %cst_154 : f32 to vector<4x256xf32>
    %179 = arith.maximumf %177, %178 : vector<4x256xf32>
    %c0_155 = arith.constant 0 : index
    %c0_156 = arith.constant 0 : index
    %c0_157 = arith.constant 0 : index
    %180 = vector.load %arg10[%c0_155, %c0_156, %c0_157] : memref<1x4x256xf32, #tpu.memory_space<vmem>>, vector<1x4x256xf32>
    %181 = vector.shape_cast %180 : vector<1x4x256xf32> to vector<4x256xf32>
    %182 = vector.shape_cast %179 : vector<4x256xf32> to vector<1x4x256xf32>
    tpu.vector_store %arg10[%c0_155, %c0_156, %c0_157], %182 {strides = array<i32>} : memref<1x4x256xf32, #tpu.memory_space<vmem>>, vector<1x4x256xf32>,
    return
  }
  func.func @transform_0(%arg0: i32) -> (i32, i32, i32, i32) {
    %c0_i32 = arith.constant 0 : i32
    %c0_i32_0 = arith.constant 0 : i32
    %c0_i32_1 = arith.constant 0 : i32
    %c0_i32_2 = arith.constant 0 : i32
    return %arg0, %c0_i32, %c0_i32_0, %c0_i32_1 : i32, i32, i32, i32
  }
  func.func @transform_1(%arg0: i32) -> (i32, i32, i32) {
    %c0_i32 = arith.constant 0 : i32
    %c0_i32_0 = arith.constant 0 : i32
    %c0_i32_1 = arith.constant 0 : i32
    return %arg0, %c0_i32, %c0_i32_0 : i32, i32, i32
  }
  func.func @transform_2(%arg0: i32) -> (i32, i32, i32) {
    %c0_i32 = arith.constant 0 : i32
    %c0_i32_0 = arith.constant 0 : i32
    %c0_i32_1 = arith.constant 0 : i32
    %c0_i32_2 = arith.constant 0 : i32
    return %c0_i32, %c0_i32_0, %c0_i32_1 : i32, i32, i32
  }
  func.func @transform_3(%arg0: i32) -> (i32, i32, i32) {
    %c0_i32 = arith.constant 0 : i32
    %c0_i32_0 = arith.constant 0 : i32
    %c0_i32_1 = arith.constant 0 : i32
    %c0_i32_2 = arith.constant 0 : i32
    return %c0_i32, %c0_i32_0, %c0_i32_1 : i32, i32, i32
  }
  func.func @transform_4(%arg0: i32) -> (i32, i32) {
    %c0_i32 = arith.constant 0 : i32
    %c0_i32_0 = arith.constant 0 : i32
    %c0_i32_1 = arith.constant 0 : i32
    return %c0_i32, %c0_i32_0 : i32, i32
  }
  func.func @transform_5(%arg0: i32) -> (i32, i32) {
    %c0_i32 = arith.constant 0 : i32
    %c0_i32_0 = arith.constant 0 : i32
    %c0_i32_1 = arith.constant 0 : i32
    return %c0_i32, %c0_i32_0 : i32, i32
  }
  func.func @transform_6(%arg0: i32) -> (i32, i32) {
    %c0_i32 = arith.constant 0 : i32
    %c0_i32_0 = arith.constant 0 : i32
    %c0_i32_1 = arith.constant 0 : i32
    return %c0_i32, %c0_i32_0 : i32, i32
  }
  func.func @transform_7(%arg0: i32) -> (i32, i32) {
    %c0_i32 = arith.constant 0 : i32
    %c0_i32_0 = arith.constant 0 : i32
    %c0_i32_1 = arith.constant 0 : i32
    return %c0_i32, %c0_i32_0 : i32, i32
  }
  func.func @transform_8(%arg0: i32) -> (i32, i32) {
    %c0_i32 = arith.constant 0 : i32
    %c0_i32_0 = arith.constant 0 : i32
    %c0_i32_1 = arith.constant 0 : i32
    return %c0_i32, %c0_i32_0 : i32, i32
  }
  func.func @transform_9(%arg0: i32) -> (i32, i32, i32) {
    %c0_i32 = arith.constant 0 : i32
    %c0_i32_0 = arith.constant 0 : i32
    %c0_i32_1 = arith.constant 0 : i32
    return %arg0, %c0_i32, %c0_i32_0 : i32, i32, i32
  }
}

</mosaic_0001>

<llo_original>
// kernel: up_bottle_forward.1
$region0: #{up_bottle_forward.1}
  #allocation0 [shape = 'u32[]', space=smem, size = 0x4, offset = 0x4, fixed_abs, tag = 'smem constant byte address 0x4 - core index']
  #allocation1 [shape = 'u32[144,128]{1,0:T(1,128)}', space=vmem, size = 0x12000, scoped, tag = 'internal scratch']
  #allocation2 [shape = 'f32[4,384]{1,0:T(4,128)}', space=vmem, size = 0x1800, scoped, tag = 'scratch operand']
  #allocation3 [shape = 'f32[72,256]{1,0:T(8,128)}', space=vmem, size = 0x12000, scoped, tag = 'scratch operand']
  #allocation4 [shape = 'f32[4,384]{1,0:T(4,128)}', space=vmem, size = 0x1800, scoped, tag = 'scratch operand']
  #allocation5 [shape = 'f32[36,256]{1,0:T(8,128)}', space=vmem, size = 0xa000, scoped, tag = 'scratch operand']
  %s0 = inlined_call_operand.vmem [shape: f32[2,4,8,8], index: 0, kind: input, shape index: {}]
  %s1 = inlined_call_operand.vmem [shape: f32[2,4,384], index: 1, kind: input, shape index: {}]
  %s2 = inlined_call_operand.vmem [shape: f32[4,8,16], index: 2, kind: input, shape index: {}]
  %s3 = inlined_call_operand.vmem [shape: f32[4,16,8], index: 3, kind: input, shape index: {}]
  %s4 = inlined_call_operand.vmem [shape: f32[4,72], index: 4, kind: input, shape index: {}]
  %s5 = inlined_call_operand.vmem [shape: f32[4,1], index: 5, kind: input, shape index: {}]
  %s6 = inlined_call_operand.vmem [shape: f32[4,36], index: 6, kind: input, shape index: {}]
  %s7 = inlined_call_operand.vmem [shape: f32[4,1], index: 7, kind: input, shape index: {}]
  %s8 = inlined_call_operand.vmem [shape: f32[2,256], index: 8, kind: input, shape index: {}]
  %s9 = inlined_call_operand.vmem [shape: f32[2,4,256], index: 9, kind: output, shape index: {}]
  %s10 = sld [smem:[#allocation0]]
  $region69: #{up_bottle_forward.1} parent=0
    _
  %s12 = ssub.s32 1, %s10
  %s13 = scalar_select 0, %s12, %s10
  loop: start=0, step=1, limit=4
  $region2: #{up_bottle_forward.1} parent=0 // loop_pre_header
    _
  $region3: #{up_bottle_forward.1} parent=0 // loop_header
    %s15 = sphi 0, %s19
    %p16 = scmp.ge.s32.totalorder %s15, 4
    %s25 = sphi 0, %s27
    %s28 = sphi 0, %s25
    %s29 = sphi 0, %s28
    %s45 = sphi 0, %s29
    %s51 = sphi 0, %s53
    %s54 = sphi 0, %s51
    %s55 = sphi 0, %s54
    %s71 = sphi 0, %s55
    %s75 = sphi 0, %s75
    %s77 = sphi 0, %s75
    %s78 = sphi 0, %s77
    %s92 = sphi 0, %s78
    %s96 = sphi 0, %s96
    %s98 = sphi 0, %s96
    %s99 = sphi 0, %s98
    %s113 = sphi 0, %s99
    %s117 = sphi 0, %s117
    %s119 = sphi 0, %s117
    %s120 = sphi 0, %s119
    %s134 = sphi 0, %s120
    %s138 = sphi 0, %s138
    %s140 = sphi 0, %s138
    %s141 = sphi 0, %s140
    %s155 = sphi 0, %s141
    %s159 = sphi 0, %s159
    %s161 = sphi 0, %s159
    %s162 = sphi 0, %s161
    %s176 = sphi 0, %s162
    %s180 = sphi 0, %s180
    %s182 = sphi 0, %s180
    %s183 = sphi 0, %s182
    %s197 = sphi 0, %s183
    %s201 = sphi 0, %s201
    %s203 = sphi 0, %s201
    %s204 = sphi 0, %s203
    %s218 = sphi 0, %s204
    %s224 = sphi 0, %s226
    %s227 = sphi 0, %s224
    %s228 = sphi 0, %s227
    %s244 = sphi 0, %s228
  $region4: #{up_bottle_forward.1} parent=0 // loop_header_branch
    %18 = sbr.rel (%p16) target = $region8
  $region5: #{up_bottle_forward.1} parent=0 // loop_body
    %s20 = ssub.s32 %s15, 1
    %s21 = ssub.s32 %s15, 2
    %s22 = sadd.s32 %s15, 1
    %s23 = ssub.s32 %s15, %s22
    %p24 = scmp.eq.s32.totalorder %s23, 0
    %s26 = sadd.s32 %s25, 1
    %s27 = scalar_select %p24, %s25, %s26
    %p30 = pneg %p24
    %p31 = scmp.eq.s32.totalorder %s15, 1
    %p32 = por %p30, %p31
    %p33 = scmp.ne.s32.totalorder %s25, %s28
    %p34 = scmp.eq.s32.totalorder %s15, 0
    %p35 = por %p33, %p34
    %p36 = scmp.ne.s32.totalorder %s25, %s28
    %p37 = scmp.eq.s32.totalorder %s20, 1
    %p38 = por %p36, %p37
    %p39 = scmp.ne.s32.totalorder %s28, %s29
    %p40 = scmp.eq.s32.totalorder %s20, 0
    %p41 = por %p39, %p40
    %p42 = scmp.ne.s32.totalorder %s28, %s29
    %p43 = scmp.eq.s32.totalorder %s21, 1
    %p44 = por %p42, %p43
    %p46 = scmp.ne.s32.totalorder %s29, %s45
    %p47 = scmp.eq.s32.totalorder %s21, 0
    %p48 = por %p46, %p47
    %s49 = ssub.s32 %s15, %s22
    %p50 = scmp.eq.s32.totalorder %s49, 0
    %s52 = sadd.s32 %s51, 1
    %s53 = scalar_select %p50, %s51, %s52
    %p56 = pneg %p50
    %p57 = scmp.eq.s32.totalorder %s15, 1
    %p58 = por %p56, %p57
    %p59 = scmp.ne.s32.totalorder %s51, %s54
    %p60 = scmp.eq.s32.totalorder %s15, 0
    %p61 = por %p59, %p60
    %p62 = scmp.ne.s32.totalorder %s51, %s54
    %p63 = scmp.eq.s32.totalorder %s20, 1
    %p64 = por %p62, %p63
    %p65 = scmp.ne.s32.totalorder %s54, %s55
    %p66 = scmp.eq.s32.totalorder %s20, 0
    %p67 = por %p65, %p66
    %p68 = scmp.ne.s32.totalorder %s54, %s55
    %p69 = scmp.eq.s32.totalorder %s21, 1
    %p70 = por %p68, %p69
    %p72 = scmp.ne.s32.totalorder %s55, %s71
    %p73 = scmp.eq.s32.totalorder %s21, 0
    %p74 = por %p72, %p73
    %s76 = sadd.s32 %s75, 1
    %p79 = scmp.eq.s32.totalorder %s15, 1
    %p80 = scmp.ne.s32.totalorder %s75, %s77
    %p81 = scmp.eq.s32.totalorder %s15, 0
    %p82 = por %p80, %p81
    %p83 = scmp.ne.s32.totalorder %s75, %s77
    %p84 = scmp.eq.s32.totalorder %s20, 1
    %p85 = por %p83, %p84
    %p86 = scmp.ne.s32.totalorder %s77, %s78
    %p87 = scmp.eq.s32.totalorder %s20, 0
    %p88 = por %p86, %p87
    %p89 = scmp.ne.s32.totalorder %s77, %s78
    %p90 = scmp.eq.s32.totalorder %s21, 1
    %p91 = por %p89, %p90
    %p93 = scmp.ne.s32.totalorder %s78, %s92
    %p94 = scmp.eq.s32.totalorder %s21, 0
    %p95 = por %p93, %p94
    %s97 = sadd.s32 %s96, 1
    %p100 = scmp.eq.s32.totalorder %s15, 1
    %p101 = scmp.ne.s32.totalorder %s96, %s98
    %p102 = scmp.eq.s32.totalorder %s15, 0
    %p103 = por %p101, %p102
    %p104 = scmp.ne.s32.totalorder %s96, %s98
    %p105 = scmp.eq.s32.totalorder %s20, 1
    %p106 = por %p104, %p105
    %p107 = scmp.ne.s32.totalorder %s98, %s99
    %p108 = scmp.eq.s32.totalorder %s20, 0
    %p109 = por %p107, %p108
    %p110 = scmp.ne.s32.totalorder %s98, %s99
    %p111 = scmp.eq.s32.totalorder %s21, 1
    %p112 = por %p110, %p111
    %p114 = scmp.ne.s32.totalorder %s99, %s113
    %p115 = scmp.eq.s32.totalorder %s21, 0
    %p116 = por %p114, %p115
    %s118 = sadd.s32 %s117, 1
    %p121 = scmp.eq.s32.totalorder %s15, 1
    %p122 = scmp.ne.s32.totalorder %s117, %s119
    %p123 = scmp.eq.s32.totalorder %s15, 0
    %p124 = por %p122, %p123
    %p125 = scmp.ne.s32.totalorder %s117, %s119
    %p126 = scmp.eq.s32.totalorder %s20, 1
    %p127 = por %p125, %p126
    %p128 = scmp.ne.s32.totalorder %s119, %s120
    %p129 = scmp.eq.s32.totalorder %s20, 0
    %p130 = por %p128, %p129
    %p131 = scmp.ne.s32.totalorder %s119, %s120
    %p132 = scmp.eq.s32.totalorder %s21, 1
    %p133 = por %p131, %p132
    %p135 = scmp.ne.s32.totalorder %s120, %s134
    %p136 = scmp.eq.s32.totalorder %s21, 0
    %p137 = por %p135, %p136
    %s139 = sadd.s32 %s138, 1
    %p142 = scmp.eq.s32.totalorder %s15, 1
    %p143 = scmp.ne.s32.totalorder %s138, %s140
    %p144 = scmp.eq.s32.totalorder %s15, 0
    %p145 = por %p143, %p144
    %p146 = scmp.ne.s32.totalorder %s138, %s140
    %p147 = scmp.eq.s32.totalorder %s20, 1
    %p148 = por %p146, %p147
    %p149 = scmp.ne.s32.totalorder %s140, %s141
    %p150 = scmp.eq.s32.totalorder %s20, 0
    %p151 = por %p149, %p150
    %p152 = scmp.ne.s32.totalorder %s140, %s141
    %p153 = scmp.eq.s32.totalorder %s21, 1
    %p154 = por %p152, %p153
    %p156 = scmp.ne.s32.totalorder %s141, %s155
    %p157 = scmp.eq.s32.totalorder %s21, 0
    %p158 = por %p156, %p157
    %s160 = sadd.s32 %s159, 1
    %p163 = scmp.eq.s32.totalorder %s15, 1
    %p164 = scmp.ne.s32.totalorder %s159, %s161
    %p165 = scmp.eq.s32.totalorder %s15, 0
    %p166 = por %p164, %p165
    %p167 = scmp.ne.s32.totalorder %s159, %s161
    %p168 = scmp.eq.s32.totalorder %s20, 1
    %p169 = por %p167, %p168
    %p170 = scmp.ne.s32.totalorder %s161, %s162
    %p171 = scmp.eq.s32.totalorder %s20, 0
    %p172 = por %p170, %p171
    %p173 = scmp.ne.s32.totalorder %s161, %s162
    %p174 = scmp.eq.s32.totalorder %s21, 1
    %p175 = por %p173, %p174
    %p177 = scmp.ne.s32.totalorder %s162, %s176
    %p178 = scmp.eq.s32.totalorder %s21, 0
    %p179 = por %p177, %p178
    %s181 = sadd.s32 %s180, 1
    %p184 = scmp.eq.s32.totalorder %s15, 1
    %p185 = scmp.ne.s32.totalorder %s180, %s182
    %p186 = scmp.eq.s32.totalorder %s15, 0
    %p187 = por %p185, %p186
    %p188 = scmp.ne.s32.totalorder %s180, %s182
    %p189 = scmp.eq.s32.totalorder %s20, 1
    %p190 = por %p188, %p189
    %p191 = scmp.ne.s32.totalorder %s182, %s183
    %p192 = scmp.eq.s32.totalorder %s20, 0
    %p193 = por %p191, %p192
    %p194 = scmp.ne.s32.totalorder %s182, %s183
    %p195 = scmp.eq.s32.totalorder %s21, 1
    %p196 = por %p194, %p195
    %p198 = scmp.ne.s32.totalorder %s183, %s197
    %p199 = scmp.eq.s32.totalorder %s21, 0
    %p200 = por %p198, %p199
    %s202 = sadd.s32 %s201, 1
    %p205 = scmp.eq.s32.totalorder %s15, 1
    %p206 = scmp.ne.s32.totalorder %s201, %s203
    %p207 = scmp.eq.s32.totalorder %s15, 0
    %p208 = por %p206, %p207
    %p209 = scmp.ne.s32.totalorder %s201, %s203
    %p210 = scmp.eq.s32.totalorder %s20, 1
    %p211 = por %p209, %p210
    %p212 = scmp.ne.s32.totalorder %s203, %s204
    %p213 = scmp.eq.s32.totalorder %s20, 0
    %p214 = por %p212, %p213
    %p215 = scmp.ne.s32.totalorder %s203, %s204
    %p216 = scmp.eq.s32.totalorder %s21, 1
    %p217 = por %p215, %p216
    %p219 = scmp.ne.s32.totalorder %s204, %s218
    %p220 = scmp.eq.s32.totalorder %s21, 0
    %p221 = por %p219, %p220
    %s222 = ssub.s32 %s15, %s22
    %p223 = scmp.eq.s32.totalorder %s222, 0
    %s225 = sadd.s32 %s224, 1
    %s226 = scalar_select %p223, %s224, %s225
    %p229 = pneg %p223
    %p230 = scmp.eq.s32.totalorder %s15, 1
    %p231 = por %p229, %p230
    %p232 = scmp.ne.s32.totalorder %s224, %s227
    %p233 = scmp.eq.s32.totalorder %s15, 0
    %p234 = por %p232, %p233
    %p235 = scmp.ne.s32.totalorder %s224, %s227
    %p236 = scmp.eq.s32.totalorder %s20, 1
    %p237 = por %p235, %p236
    %p238 = scmp.ne.s32.totalorder %s227, %s228
    %p239 = scmp.eq.s32.totalorder %s20, 0
    %p240 = por %p238, %p239
    %p241 = scmp.ne.s32.totalorder %s227, %s228
    %p242 = scmp.eq.s32.totalorder %s21, 1
    %p243 = por %p241, %p242
    %p245 = scmp.ne.s32.totalorder %s228, %s244
    %p246 = scmp.eq.s32.totalorder %s21, 0
    %p247 = por %p245, %p246
    %p248 = scmp.le.s32.totalorder 1, %s15
    %p249 = scmp.lt.s32.totalorder %s15, 3
    %p250 = pnand %p248, %p249
    %p251 = pneg %p250
    // Predicated region
    $region9: #{up_bottle_forward.1} parent=5 // pred_check
      _
    $region10: #{up_bottle_forward.1} parent=5 // pred_check_branch
      %253 = sbr.rel (%p250) target = $region12
    $region11: #{up_bottle_forward.1} parent=5 // pred_region
      %s254 = ssub.s32 %s15, 1
      // Predicated region
      $region13: #{up_bottle_forward.1} parent=11 // pred_check
        %p255 = pneg %p88
      $region14: #{up_bottle_forward.1} parent=11 // pred_check_branch
        %257 = sbr.rel (%p255) target = $region16
      $region15: #{up_bottle_forward.1} parent=11 // pred_region
        _
      $region16: #{up_bottle_forward.1} parent=11 // pred_fallthru
        _
      // Predicated region
      $region17: #{up_bottle_forward.1} parent=11 // pred_check
        %p258 = pneg %p109
      $region18: #{up_bottle_forward.1} parent=11 // pred_check_branch
        %260 = sbr.rel (%p258) target = $region20
      $region19: #{up_bottle_forward.1} parent=11 // pred_region
        _
      $region20: #{up_bottle_forward.1} parent=11 // pred_fallthru
        _
      // Predicated region
      $region21: #{up_bottle_forward.1} parent=11 // pred_check
        %p261 = pneg %p130
      $region22: #{up_bottle_forward.1} parent=11 // pred_check_branch
        %263 = sbr.rel (%p261) target = $region24
      $region23: #{up_bottle_forward.1} parent=11 // pred_region
        _
      $region24: #{up_bottle_forward.1} parent=11 // pred_fallthru
        _
      // Predicated region
      $region25: #{up_bottle_forward.1} parent=11 // pred_check
        %p264 = pneg %p151
      $region26: #{up_bottle_forward.1} parent=11 // pred_check_branch
        %266 = sbr.rel (%p264) target = $region28
      $region27: #{up_bottle_forward.1} parent=11 // pred_region
        _
      $region28: #{up_bottle_forward.1} parent=11 // pred_fallthru
        _
      // Predicated region
      $region29: #{up_bottle_forward.1} parent=11 // pred_check
        %p267 = pneg %p172
      $region30: #{up_bottle_forward.1} parent=11 // pred_check_branch
        %269 = sbr.rel (%p267) target = $region32
      $region31: #{up_bottle_forward.1} parent=11 // pred_region
        _
      $region32: #{up_bottle_forward.1} parent=11 // pred_fallthru
        _
      // Predicated region
      $region33: #{up_bottle_forward.1} parent=11 // pred_check
        %p270 = pneg %p193
      $region34: #{up_bottle_forward.1} parent=11 // pred_check_branch
        %272 = sbr.rel (%p270) target = $region36
      $region35: #{up_bottle_forward.1} parent=11 // pred_region
        _
      $region36: #{up_bottle_forward.1} parent=11 // pred_fallthru
        _
      // Predicated region
      $region37: #{up_bottle_forward.1} parent=11 // pred_check
        %p273 = pneg %p214
      $region38: #{up_bottle_forward.1} parent=11 // pred_check_branch
        %275 = sbr.rel (%p273) target = $region40
      $region39: #{up_bottle_forward.1} parent=11 // pred_region
        _
      $region40: #{up_bottle_forward.1} parent=11 // pred_fallthru
        _
    $region12: #{up_bottle_forward.1} parent=5 // pred_fallthru
      _
    %p276 = scmp.lt.s32.totalorder %s15, 2
    // Predicated region
    $region41: #{up_bottle_forward.1} parent=5 // pred_check
      %p277 = pneg %p276
    $region42: #{up_bottle_forward.1} parent=5 // pred_check_branch
      %279 = sbr.rel (%p277) target = $region44
    $region43: #{up_bottle_forward.1} parent=5 // pred_region
      // Predicated region
      $region45: #{up_bottle_forward.1} parent=43 // pred_check
        %p280 = pneg %p35
      $region46: #{up_bottle_forward.1} parent=43 // pred_check_branch
        %282 = sbr.rel (%p280) target = $region48
      $region47: #{up_bottle_forward.1} parent=43 // pred_region
        %p283 = scmp.lt.s32.totalorder %s15, 1
        %s284 = scalar_select %p283, %s15, 1
        %s285 = smul.addr %s284, 4
        %s286 = smul.addr %s285, 8
        %s287 = scalar_lea.vmem %s0, %s286
      $region48: #{up_bottle_forward.1} parent=43 // pred_fallthru
        _
      // Predicated region
      $region49: #{up_bottle_forward.1} parent=43 // pred_check
        %p288 = pneg %p61
      $region50: #{up_bottle_forward.1} parent=43 // pred_check_branch
        %290 = sbr.rel (%p288) target = $region52
      $region51: #{up_bottle_forward.1} parent=43 // pred_region
        %p291 = scmp.lt.s32.totalorder %s15, 1
        %s292 = scalar_select %p291, %s15, 1
        %s293 = smul.addr %s292, 3
        %s294 = smul.addr %s293, 4
        %s295 = scalar_lea.vmem %s1, %s294
      $region52: #{up_bottle_forward.1} parent=43 // pred_fallthru
        _
    $region44: #{up_bottle_forward.1} parent=5 // pred_fallthru
      _
    %p296 = scmp.le.s32.totalorder 1, %s15
    %p297 = scmp.lt.s32.totalorder %s15, 3
    %p298 = pnand %p296, %p297
    %p299 = pneg %p298
    // Predicated region
    $region53: #{up_bottle_forward.1} parent=5 // pred_check
      _
    $region54: #{up_bottle_forward.1} parent=5 // pred_check_branch
      %301 = sbr.rel (%p298) target = $region56
    $region55: #{up_bottle_forward.1} parent=5 // pred_region
      %s302 = ssub.s32 %s15, 1
      %p303 = scmp.lt.s32.totalorder %s20, 1
      %s304 = scalar_select %p303, %s20, 1
      %s305 = smul.addr %s304, 4
      %s306 = smul.addr %s305, 8
      %s307 = scalar_lea.vmem %s0, %s306
      %p308 = pneg %p41
      %p309 = pneg %p38
      %p310 = scmp.lt.s32.totalorder %s20, 1
      %s311 = scalar_select %p310, %s20, 1
      %s312 = smul.addr %s311, 3
      %s313 = smul.addr %s312, 4
      %s314 = scalar_lea.vmem %s1, %s313
      %p315 = pneg %p67
      %p316 = pneg %p64
      %p317 = pneg %p88
      %p318 = pneg %p85
      %p319 = pneg %p109
      %p320 = pneg %p106
      %p321 = pneg %p130
      %p322 = pneg %p127
      %p323 = pneg %p151
      %p324 = pneg %p148
      %p325 = pneg %p172
      %p326 = pneg %p169
      %p327 = pneg %p193
      %p328 = pneg %p190
      %p329 = pneg %p214
      %p330 = pneg %p211
      %p331 = pneg %p240
      %p332 = pneg %p237
      %p333 = scmp.lt.s32.totalorder %s20, 1
      %s334 = scalar_select %p333, %s20, 1
      %s335 = smul.addr %s334, 2
      %s336 = smul.addr %s335, 4
      %s337 = scalar_lea.vmem %s9, %s336
      %p338 = scmp.lt.s32.totalorder %s20, 1
      %s339 = scalar_select %p338, %s20, 1
      %s340 = smul.addr %s339, 4
      %s341 = smul.addr %s340, 8
      %s342 = scalar_lea.vmem %s0, %s341
      %p343 = scmp.lt.s32.totalorder %s20, 1
      %s344 = scalar_select %p343, %s20, 1
      %s345 = smul.addr %s344, 3
      %s346 = smul.addr %s345, 4
      %s347 = scalar_lea.vmem %s1, %s346
      %p348 = scmp.lt.s32.totalorder %s20, 1
      %s349 = scalar_select %p348, %s20, 1
      %s350 = smul.addr %s349, 2
      %s351 = smul.addr %s350, 4
      %s352 = scalar_lea.vmem %s9, %s351
      %v353 = vld [vmem:[%s342] sm:$0xff]
      %v354 = vld [vmem:[%s342 + $0x8] sm:$0xff]
      %v355 = vld [vmem:[%s342 + $0x10] sm:$0xff]
      %v356 = vld [vmem:[%s342 + $0x18] sm:$0xff]
      %v357 = vld [vmem:[%s2] sm:$0xff]
      %v358 = vld [vmem:[%s2 + $0x8] sm:$0xff]
      %v359 = vld [vmem:[%s2 + $0x10] sm:$0xff]
      %v360 = vld [vmem:[%s2 + $0x18] sm:$0xff]
      %vm361 = vcmask 64512
      %v363 = vsel %vm361, %v353, 0
      %365 = vmatprep.subr.mxu0 0.0
      %366 = vmatpush1.msra.mxu0 %v357
      %367 = vmatprep.subr.mxu0 0.0
      %368 = vmatpush1.msra.mxu0 0.0
      %369 = vmatprep.subr.mxu0 0.0
      %370 = vmatpush1.msra.mxu0 0.0
      %371 = vmatprep.subr.mxu0 0.0
      %372 = vmatpush1.msra.mxu0 0.0
      %373 = vmatprep.subr.mxu0 0.0
      %374 = vmatpush1.msra.mxu0 0.0
      %375 = vmatprep.subr.mxu0 0.0
      %376 = vmatpush1.msra.mxu0 0.0
      %377 = vmatprep.subr.mxu0 0.0
      %378 = vmatpush1.msra.mxu0 0.0
      %379 = vmatprep.subr.mxu0 0.0
      %380 = vmatpush1.msra.mxu0 0.0
      %381 = vmatprep.subr.mxu0 0.0
      %382 = vmatpush1.msra.mxu0 0.0
      %383 = vmatprep.subr.mxu0 0.0
      %384 = vmatpush1.msra.mxu0 0.0
      %385 = vmatprep.subr.mxu0 0.0
      %386 = vmatpush1.msra.mxu0 0.0
      %387 = vmatprep.subr.mxu0 0.0
      %388 = vmatpush1.msra.mxu0 0.0
      %389 = vmatprep.subr.mxu0 0.0
      %390 = vmatpush1.msra.mxu0 0.0
      %391 = vmatprep.subr.mxu0 0.0
      %392 = vmatpush1.msra.mxu0 0.0
      %393 = vmatprep.subr.mxu0 0.0
      %394 = vmatpush1.msra.mxu0 0.0
      %395 = vmatprep.subr.mxu0 0.0
      %396 = vmatpush1.msra.mxu0 0.0
      %397 = vmatprep.subr.mxu0 0.0
      %398 = vmatpush1.msra.mxu0 0.0
      %399 = vmatprep.subr.mxu0 0.0
      %400 = vmatpush1.msra.mxu0 0.0
      %401 = vmatprep.subr.mxu0 0.0
      %402 = vmatpush1.msra.mxu0 0.0
      %403 = vmatprep.subr.mxu0 0.0
      %404 = vmatpush1.msra.mxu0 0.0
      %405 = vmatprep.subr.mxu0 0.0
      %406 = vmatpush1.msra.mxu0 0.0
      %407 = vmatprep.subr.mxu0 0.0
      %408 = vmatpush1.msra.mxu0 0.0
      %409 = vmatprep.subr.mxu0 0.0
      %410 = vmatpush1.msra.mxu0 0.0
      %411 = vmatprep.subr.mxu0 0.0
      %412 = vmatpush1.msra.mxu0 0.0
      %413 = vmatprep.subr.mxu0 0.0
      %414 = vmatpush1.msra.mxu0 0.0
      %415 = vmatprep.subr.mxu0 0.0
      %416 = vmatpush1.msra.mxu0 0.0
      %417 = vmatprep.subr.mxu0 0.0
      %418 = vmatpush1.msra.mxu0 0.0
      %419 = vmatprep.subr.mxu0 0.0
      %420 = vmatpush1.msra.mxu0 0.0
      %421 = vmatprep.subr.mxu0 0.0
      %422 = vmatpush1.msra.mxu0 0.0
      %423 = vmatprep.subr.mxu0 0.0
      %424 = vmatpush1.msra.mxu0 0.0
      %425 = vmatprep.subr.mxu0 0.0
      %426 = vmatpush1.msra.mxu0 0.0
      %427 = vmatprep.subr.mxu0 0.0
      %428 = vmatpush1.msra.mxu0 0.0
      %429 = vmatprep.mubr.f32.mxu0 0.0
      %430 = vmatmul.mubr.f32.gmra.mrb[0].mxu0 %v363
      %v431 = vpop.f32.mrb[0].mxu0
      %v432 = vadd.f32 0.0, %v431
      %v433 = vpop.f32.mrb[0].mxu0
      %434 = vdwg.mxu0
      %v436 = vsel %vm361, %v354, 0
      %438 = vmatprep.subr.mxu0 0.0
      %439 = vmatpush1.msra.mxu0 %v358
      %440 = vmatprep.subr.mxu0 0.0
      %441 = vmatpush1.msra.mxu0 0.0
      %442 = vmatprep.subr.mxu0 0.0
      %443 = vmatpush1.msra.mxu0 0.0
      %444 = vmatprep.subr.mxu0 0.0
      %445 = vmatpush1.msra.mxu0 0.0
      %446 = vmatprep.subr.mxu0 0.0
      %447 = vmatpush1.msra.mxu0 0.0
      %448 = vmatprep.subr.mxu0 0.0
      %449 = vmatpush1.msra.mxu0 0.0
      %450 = vmatprep.subr.mxu0 0.0
      %451 = vmatpush1.msra.mxu0 0.0
      %452 = vmatprep.subr.mxu0 0.0
      %453 = vmatpush1.msra.mxu0 0.0
      %454 = vmatprep.subr.mxu0 0.0
      %455 = vmatpush1.msra.mxu0 0.0
      %456 = vmatprep.subr.mxu0 0.0
      %457 = vmatpush1.msra.mxu0 0.0
      %458 = vmatprep.subr.mxu0 0.0
      %459 = vmatpush1.msra.mxu0 0.0
      %460 = vmatprep.subr.mxu0 0.0
      %461 = vmatpush1.msra.mxu0 0.0
      %462 = vmatprep.subr.mxu0 0.0
      %463 = vmatpush1.msra.mxu0 0.0
      %464 = vmatprep.subr.mxu0 0.0
      %465 = vmatpush1.msra.mxu0 0.0
      %466 = vmatprep.subr.mxu0 0.0
      %467 = vmatpush1.msra.mxu0 0.0
      %468 = vmatprep.subr.mxu0 0.0
      %469 = vmatpush1.msra.mxu0 0.0
      %470 = vmatprep.subr.mxu0 0.0
      %471 = vmatpush1.msra.mxu0 0.0
      %472 = vmatprep.subr.mxu0 0.0
      %473 = vmatpush1.msra.mxu0 0.0
      %474 = vmatprep.subr.mxu0 0.0
      %475 = vmatpush1.msra.mxu0 0.0
      %476 = vmatprep.subr.mxu0 0.0
      %477 = vmatpush1.msra.mxu0 0.0
      %478 = vmatprep.subr.mxu0 0.0
      %479 = vmatpush1.msra.mxu0 0.0
      %480 = vmatprep.subr.mxu0 0.0
      %481 = vmatpush1.msra.mxu0 0.0
      %482 = vmatprep.subr.mxu0 0.0
      %483 = vmatpush1.msra.mxu0 0.0
      %484 = vmatprep.subr.mxu0 0.0
      %485 = vmatpush1.msra.mxu0 0.0
      %486 = vmatprep.subr.mxu0 0.0
      %487 = vmatpush1.msra.mxu0 0.0
      %488 = vmatprep.subr.mxu0 0.0
      %489 = vmatpush1.msra.mxu0 0.0
      %490 = vmatprep.subr.mxu0 0.0
      %491 = vmatpush1.msra.mxu0 0.0
      %492 = vmatprep.subr.mxu0 0.0
      %493 = vmatpush1.msra.mxu0 0.0
      %494 = vmatprep.subr.mxu0 0.0
      %495 = vmatpush1.msra.mxu0 0.0
      %496 = vmatprep.subr.mxu0 0.0
      %497 = vmatpush1.msra.mxu0 0.0
      %498 = vmatprep.subr.mxu0 0.0
      %499 = vmatpush1.msra.mxu0 0.0
      %500 = vmatprep.subr.mxu0 0.0
      %501 = vmatpush1.msra.mxu0 0.0
      %502 = vmatprep.mubr.f32.mxu0 0.0
      %503 = vmatmul.mubr.f32.gmra.mrb[0].mxu0 %v436
      %v504 = vpop.f32.mrb[0].mxu0
      %v505 = vadd.f32 0.0, %v504
      %v506 = vpop.f32.mrb[0].mxu0
      %507 = vdwg.mxu0
      %v509 = vsel %vm361, %v355, 0
      %511 = vmatprep.subr.mxu0 0.0
      %512 = vmatpush1.msra.mxu0 %v359
      %513 = vmatprep.subr.mxu0 0.0
      %514 = vmatpush1.msra.mxu0 0.0
      %515 = vmatprep.subr.mxu0 0.0
      %516 = vmatpush1.msra.mxu0 0.0
      %517 = vmatprep.subr.mxu0 0.0
      %518 = vmatpush1.msra.mxu0 0.0
      %519 = vmatprep.subr.mxu0 0.0
      %520 = vmatpush1.msra.mxu0 0.0
      %521 = vmatprep.subr.mxu0 0.0
      %522 = vmatpush1.msra.mxu0 0.0
      %523 = vmatprep.subr.mxu0 0.0
      %524 = vmatpush1.msra.mxu0 0.0
      %525 = vmatprep.subr.mxu0 0.0
      %526 = vmatpush1.msra.mxu0 0.0
      %527 = vmatprep.subr.mxu0 0.0
      %528 = vmatpush1.msra.mxu0 0.0
      %529 = vmatprep.subr.mxu0 0.0
      %530 = vmatpush1.msra.mxu0 0.0
      %531 = vmatprep.subr.mxu0 0.0
      %532 = vmatpush1.msra.mxu0 0.0
      %533 = vmatprep.subr.mxu0 0.0
      %534 = vmatpush1.msra.mxu0 0.0
      %535 = vmatprep.subr.mxu0 0.0
      %536 = vmatpush1.msra.mxu0 0.0
      %537 = vmatprep.subr.mxu0 0.0
      %538 = vmatpush1.msra.mxu0 0.0
      %539 = vmatprep.subr.mxu0 0.0
      %540 = vmatpush1.msra.mxu0 0.0
      %541 = vmatprep.subr.mxu0 0.0
      %542 = vmatpush1.msra.mxu0 0.0
      %543 = vmatprep.subr.mxu0 0.0
      %544 = vmatpush1.msra.mxu0 0.0
      %545 = vmatprep.subr.mxu0 0.0
      %546 = vmatpush1.msra.mxu0 0.0
      %547 = vmatprep.subr.mxu0 0.0
      %548 = vmatpush1.msra.mxu0 0.0
      %549 = vmatprep.subr.mxu0 0.0
      %550 = vmatpush1.msra.mxu0 0.0
      %551 = vmatprep.subr.mxu0 0.0
      %552 = vmatpush1.msra.mxu0 0.0
      %553 = vmatprep.subr.mxu0 0.0
      %554 = vmatpush1.msra.mxu0 0.0
      %555 = vmatprep.subr.mxu0 0.0
      %556 = vmatpush1.msra.mxu0 0.0
      %557 = vmatprep.subr.mxu0 0.0
      %558 = vmatpush1.msra.mxu0 0.0
      %559 = vmatprep.subr.mxu0 0.0
      %560 = vmatpush1.msra.mxu0 0.0
      %561 = vmatprep.subr.mxu0 0.0
      %562 = vmatpush1.msra.mxu0 0.0
      %563 = vmatprep.subr.mxu0 0.0
      %564 = vmatpush1.msra.mxu0 0.0
      %565 = vmatprep.subr.mxu0 0.0
      %566 = vmatpush1.msra.mxu0 0.0
      %567 = vmatprep.subr.mxu0 0.0
      %568 = vmatpush1.msra.mxu0 0.0
      %569 = vmatprep.subr.mxu0 0.0
      %570 = vmatpush1.msra.mxu0 0.0
      %571 = vmatprep.subr.mxu0 0.0
      %572 = vmatpush1.msra.mxu0 0.0
      %573 = vmatprep.subr.mxu0 0.0
      %574 = vmatpush1.msra.mxu0 0.0
      %575 = vmatprep.mubr.f32.mxu0 0.0
      %576 = vmatmul.mubr.f32.gmra.mrb[0].mxu0 %v509
      %v577 = vpop.f32.mrb[0].mxu0
      %v578 = vadd.f32 0.0, %v577
      %v579 = vpop.f32.mrb[0].mxu0
      %580 = vdwg.mxu0
      %v582 = vsel %vm361, %v356, 0
      %584 = vmatprep.subr.mxu0 0.0
      %585 = vmatpush1.msra.mxu0 %v360
      %586 = vmatprep.subr.mxu0 0.0
      %587 = vmatpush1.msra.mxu0 0.0
      %588 = vmatprep.subr.mxu0 0.0
      %589 = vmatpush1.msra.mxu0 0.0
      %590 = vmatprep.subr.mxu0 0.0
      %591 = vmatpush1.msra.mxu0 0.0
      %592 = vmatprep.subr.mxu0 0.0
      %593 = vmatpush1.msra.mxu0 0.0
      %594 = vmatprep.subr.mxu0 0.0
      %595 = vmatpush1.msra.mxu0 0.0
      %596 = vmatprep.subr.mxu0 0.0
      %597 = vmatpush1.msra.mxu0 0.0
      %598 = vmatprep.subr.mxu0 0.0
      %599 = vmatpush1.msra.mxu0 0.0
      %600 = vmatprep.subr.mxu0 0.0
      %601 = vmatpush1.msra.mxu0 0.0
      %602 = vmatprep.subr.mxu0 0.0
      %603 = vmatpush1.msra.mxu0 0.0
      %604 = vmatprep.subr.mxu0 0.0
      %605 = vmatpush1.msra.mxu0 0.0
      %606 = vmatprep.subr.mxu0 0.0
      %607 = vmatpush1.msra.mxu0 0.0
      %608 = vmatprep.subr.mxu0 0.0
      %609 = vmatpush1.msra.mxu0 0.0
      %610 = vmatprep.subr.mxu0 0.0
      %611 = vmatpush1.msra.mxu0 0.0
      %612 = vmatprep.subr.mxu0 0.0
      %613 = vmatpush1.msra.mxu0 0.0
      %614 = vmatprep.subr.mxu0 0.0
      %615 = vmatpush1.msra.mxu0 0.0
      %616 = vmatprep.subr.mxu0 0.0
      %617 = vmatpush1.msra.mxu0 0.0
      %618 = vmatprep.subr.mxu0 0.0
      %619 = vmatpush1.msra.mxu0 0.0
      %620 = vmatprep.subr.mxu0 0.0
      %621 = vmatpush1.msra.mxu0 0.0
      %622 = vmatprep.subr.mxu0 0.0
      %623 = vmatpush1.msra.mxu0 0.0
      %624 = vmatprep.subr.mxu0 0.0
      %625 = vmatpush1.msra.mxu0 0.0
      %626 = vmatprep.subr.mxu0 0.0
      %627 = vmatpush1.msra.mxu0 0.0
      %628 = vmatprep.subr.mxu0 0.0
      %629 = vmatpush1.msra.mxu0 0.0
      %630 = vmatprep.subr.mxu0 0.0
      %631 = vmatpush1.msra.mxu0 0.0
      %632 = vmatprep.subr.mxu0 0.0
      %633 = vmatpush1.msra.mxu0 0.0
      %634 = vmatprep.subr.mxu0 0.0
      %635 = vmatpush1.msra.mxu0 0.0
      %636 = vmatprep.subr.mxu0 0.0
      %637 = vmatpush1.msra.mxu0 0.0
      %638 = vmatprep.subr.mxu0 0.0
      %639 = vmatpush1.msra.mxu0 0.0
      %640 = vmatprep.subr.mxu0 0.0
      %641 = vmatpush1.msra.mxu0 0.0
      %642 = vmatprep.subr.mxu0 0.0
      %643 = vmatpush1.msra.mxu0 0.0
      %644 = vmatprep.subr.mxu0 0.0
      %645 = vmatpush1.msra.mxu0 0.0
      %646 = vmatprep.subr.mxu0 0.0
      %647 = vmatpush1.msra.mxu0 0.0
      %648 = vmatprep.mubr.f32.mxu0 0.0
      %649 = vmatmul.mubr.f32.gmra.mrb[0].mxu0 %v582
      %v650 = vpop.f32.mrb[0].mxu0
      %v651 = vadd.f32 0.0, %v650
      %v652 = vpop.f32.mrb[0].mxu0
      %653 = vdwg.mxu0
      %v654 = vld [vmem:[%s3] sm:$0xff]
      %v655 = vld [vmem:[%s3 + $0x8] sm:$0xff]
      %v656 = vld [vmem:[%s3 + $0x10] sm:$0xff]
      %v657 = vld [vmem:[%s3 + $0x18] sm:$0xff]
      %v658 = vld [vmem:[%s3 + $0x20] sm:$0xff]
      %v659 = vld [vmem:[%s3 + $0x28] sm:$0xff]
      %v660 = vld [vmem:[%s3 + $0x30] sm:$0xff]
      %v661 = vld [vmem:[%s3 + $0x38] sm:$0xff]
      %v663 = vsel %vm361, %v654, 0
      %v666 = vsel %vm361, %v655, 0
      %668 = vmatprep.subr.mxu0 0.0
      %669 = vmatpush1.msra.mxu0 %v432
      %670 = vmatprep.subr.mxu0 0.0
      %671 = vmatpush1.msra.mxu0 0.0
      %672 = vmatprep.subr.mxu0 0.0
      %673 = vmatpush1.msra.mxu0 0.0
      %674 = vmatprep.subr.mxu0 0.0
      %675 = vmatpush1.msra.mxu0 0.0
      %676 = vmatprep.subr.mxu0 0.0
      %677 = vmatpush1.msra.mxu0 0.0
      %678 = vmatprep.subr.mxu0 0.0
      %679 = vmatpush1.msra.mxu0 0.0
      %680 = vmatprep.subr.mxu0 0.0
      %681 = vmatpush1.msra.mxu0 0.0
      %682 = vmatprep.subr.mxu0 0.0
      %683 = vmatpush1.msra.mxu0 0.0
      %684 = vmatprep.subr.mxu0 0.0
      %685 = vmatpush1.msra.mxu0 0.0
      %686 = vmatprep.subr.mxu0 0.0
      %687 = vmatpush1.msra.mxu0 0.0
      %688 = vmatprep.subr.mxu0 0.0
      %689 = vmatpush1.msra.mxu0 0.0
      %690 = vmatprep.subr.mxu0 0.0
      %691 = vmatpush1.msra.mxu0 0.0
      %692 = vmatprep.subr.mxu0 0.0
      %693 = vmatpush1.msra.mxu0 0.0
      %694 = vmatprep.subr.mxu0 0.0
      %695 = vmatpush1.msra.mxu0 0.0
      %696 = vmatprep.subr.mxu0 0.0
      %697 = vmatpush1.msra.mxu0 0.0
      %698 = vmatprep.subr.mxu0 0.0
      %699 = vmatpush1.msra.mxu0 0.0
      %700 = vmatprep.subr.mxu0 0.0
      %701 = vmatpush1.msra.mxu0 0.0
      %702 = vmatprep.subr.mxu0 0.0
      %703 = vmatpush1.msra.mxu0 0.0
      %704 = vmatprep.subr.mxu0 0.0
      %705 = vmatpush1.msra.mxu0 0.0
      %706 = vmatprep.subr.mxu0 0.0
      %707 = vmatpush1.msra.mxu0 0.0
      %708 = vmatprep.subr.mxu0 0.0
      %709 = vmatpush1.msra.mxu0 0.0
      %710 = vmatprep.subr.mxu0 0.0
      %711 = vmatpush1.msra.mxu0 0.0
      %712 = vmatprep.subr.mxu0 0.0
      %713 = vmatpush1.msra.mxu0 0.0
      %714 = vmatprep.subr.mxu0 0.0
      %715 = vmatpush1.msra.mxu0 0.0
      %716 = vmatprep.subr.mxu0 0.0
      %717 = vmatpush1.msra.mxu0 0.0
      %718 = vmatprep.subr.mxu0 0.0
      %719 = vmatpush1.msra.mxu0 0.0
      %720 = vmatprep.subr.mxu0 0.0
      %721 = vmatpush1.msra.mxu0 0.0
      %722 = vmatprep.subr.mxu0 0.0
      %723 = vmatpush1.msra.mxu0 0.0
      %724 = vmatprep.subr.mxu0 0.0
      %725 = vmatpush1.msra.mxu0 0.0
      %726 = vmatprep.subr.mxu0 0.0
      %727 = vmatpush1.msra.mxu0 0.0
      %728 = vmatprep.subr.mxu0 0.0
      %729 = vmatpush1.msra.mxu0 0.0
      %730 = vmatprep.subr.mxu0 0.0
      %731 = vmatpush1.msra.mxu0 0.0
      %732 = vmatprep.mubr.f32.mxu0 0.0
      %733 = vmatmul.mubr.f32.gmra.mrb[0].mxu0 %v663
      %v734 = vpop.f32.mrb[0].mxu0
      %v735 = vadd.f32 0.0, %v734
      %v736 = vpop.f32.mrb[0].mxu0
      %737 = vmatprep.mubr.f32.mxu0 0.0
      %738 = vmatmul.mubr.f32.gmra.mrb[0].mxu0 %v666
      %v739 = vpop.f32.mrb[0].mxu0
      %v740 = vadd.f32 0.0, %v739
      %v741 = vpop.f32.mrb[0].mxu0
      %742 = vdwg.mxu0
      %v744 = vsel %vm361, %v656, 0
      %v747 = vsel %vm361, %v657, 0
      %749 = vmatprep.subr.mxu0 0.0
      %750 = vmatpush1.msra.mxu0 %v505
      %751 = vmatprep.subr.mxu0 0.0
      %752 = vmatpush1.msra.mxu0 0.0
      %753 = vmatprep.subr.mxu0 0.0
      %754 = vmatpush1.msra.mxu0 0.0
      %755 = vmatprep.subr.mxu0 0.0
      %756 = vmatpush1.msra.mxu0 0.0
      %757 = vmatprep.subr.mxu0 0.0
      %758 = vmatpush1.msra.mxu0 0.0
      %759 = vmatprep.subr.mxu0 0.0
      %760 = vmatpush1.msra.mxu0 0.0
      %761 = vmatprep.subr.mxu0 0.0
      %762 = vmatpush1.msra.mxu0 0.0
      %763 = vmatprep.subr.mxu0 0.0
      %764 = vmatpush1.msra.mxu0 0.0
      %765 = vmatprep.subr.mxu0 0.0
      %766 = vmatpush1.msra.mxu0 0.0
      %767 = vmatprep.subr.mxu0 0.0
      %768 = vmatpush1.msra.mxu0 0.0
      %769 = vmatprep.subr.mxu0 0.0
      %770 = vmatpush1.msra.mxu0 0.0
      %771 = vmatprep.subr.mxu0 0.0
      %772 = vmatpush1.msra.mxu0 0.0
      %773 = vmatprep.subr.mxu0 0.0
      %774 = vmatpush1.msra.mxu0 0.0
      %775 = vmatprep.subr.mxu0 0.0
      %776 = vmatpush1.msra.mxu0 0.0
      %777 = vmatprep.subr.mxu0 0.0
      %778 = vmatpush1.msra.mxu0 0.0
      %779 = vmatprep.subr.mxu0 0.0
      %780 = vmatpush1.msra.mxu0 0.0
      %781 = vmatprep.subr.mxu0 0.0
      %782 = vmatpush1.msra.mxu0 0.0
      %783 = vmatprep.subr.mxu0 0.0
      %784 = vmatpush1.msra.mxu0 0.0
      %785 = vmatprep.subr.mxu0 0.0
      %786 = vmatpush1.msra.mxu0 0.0
      %787 = vmatprep.subr.mxu0 0.0
      %788 = vmatpush1.msra.mxu0 0.0
      %789 = vmatprep.subr.mxu0 0.0
      %790 = vmatpush1.msra.mxu0 0.0
      %791 = vmatprep.subr.mxu0 0.0
      %792 = vmatpush1.msra.mxu0 0.0
      %793 = vmatprep.subr.mxu0 0.0
      %794 = vmatpush1.msra.mxu0 0.0
      %795 = vmatprep.subr.mxu0 0.0
      %796 = vmatpush1.msra.mxu0 0.0
      %797 = vmatprep.subr.mxu0 0.0
      %798 = vmatpush1.msra.mxu0 0.0
      %799 = vmatprep.subr.mxu0 0.0
      %800 = vmatpush1.msra.mxu0 0.0
      %801 = vmatprep.subr.mxu0 0.0
      %802 = vmatpush1.msra.mxu0 0.0
      %803 = vmatprep.subr.mxu0 0.0
      %804 = vmatpush1.msra.mxu0 0.0
      %805 = vmatprep.subr.mxu0 0.0
      %806 = vmatpush1.msra.mxu0 0.0
      %807 = vmatprep.subr.mxu0 0.0
      %808 = vmatpush1.msra.mxu0 0.0
      %809 = vmatprep.subr.mxu0 0.0
      %810 = vmatpush1.msra.mxu0 0.0
      %811 = vmatprep.subr.mxu0 0.0
      %812 = vmatpush1.msra.mxu0 0.0
      %813 = vmatprep.mubr.f32.mxu0 0.0
      %814 = vmatmul.mubr.f32.gmra.mrb[0].mxu0 %v744
      %v815 = vpop.f32.mrb[0].mxu0
      %v816 = vadd.f32 0.0, %v815
      %v817 = vpop.f32.mrb[0].mxu0
      %818 = vmatprep.mubr.f32.mxu0 0.0
      %819 = vmatmul.mubr.f32.gmra.mrb[0].mxu0 %v747
      %v820 = vpop.f32.mrb[0].mxu0
      %v821 = vadd.f32 0.0, %v820
      %v822 = vpop.f32.mrb[0].mxu0
      %823 = vdwg.mxu0
      %v825 = vsel %vm361, %v658, 0
      %v828 = vsel %vm361, %v659, 0
      %830 = vmatprep.subr.mxu0 0.0
      %831 = vmatpush1.msra.mxu0 %v578
      %832 = vmatprep.subr.mxu0 0.0
      %833 = vmatpush1.msra.mxu0 0.0
      %834 = vmatprep.subr.mxu0 0.0
      %835 = vmatpush1.msra.mxu0 0.0
      %836 = vmatprep.subr.mxu0 0.0
      %837 = vmatpush1.msra.mxu0 0.0
      %838 = vmatprep.subr.mxu0 0.0
      %839 = vmatpush1.msra.mxu0 0.0
      %840 = vmatprep.subr.mxu0 0.0
      %841 = vmatpush1.msra.mxu0 0.0
      %842 = vmatprep.subr.mxu0 0.0
      %843 = vmatpush1.msra.mxu0 0.0
      %844 = vmatprep.subr.mxu0 0.0
      %845 = vmatpush1.msra.mxu0 0.0
      %846 = vmatprep.subr.mxu0 0.0
      %847 = vmatpush1.msra.mxu0 0.0
      %848 = vmatprep.subr.mxu0 0.0
      %849 = vmatpush1.msra.mxu0 0.0
      %850 = vmatprep.subr.mxu0 0.0
      %851 = vmatpush1.msra.mxu0 0.0
      %852 = vmatprep.subr.mxu0 0.0
      %853 = vmatpush1.msra.mxu0 0.0
      %854 = vmatprep.subr.mxu0 0.0
      %855 = vmatpush1.msra.mxu0 0.0
      %856 = vmatprep.subr.mxu0 0.0
      %857 = vmatpush1.msra.mxu0 0.0
      %858 = vmatprep.subr.mxu0 0.0
      %859 = vmatpush1.msra.mxu0 0.0
      %860 = vmatprep.subr.mxu0 0.0
      %861 = vmatpush1.msra.mxu0 0.0
      %862 = vmatprep.subr.mxu0 0.0
      %863 = vmatpush1.msra.mxu0 0.0
      %864 = vmatprep.subr.mxu0 0.0
      %865 = vmatpush1.msra.mxu0 0.0
      %866 = vmatprep.subr.mxu0 0.0
      %867 = vmatpush1.msra.mxu0 0.0
      %868 = vmatprep.subr.mxu0 0.0
      %869 = vmatpush1.msra.mxu0 0.0
      %870 = vmatprep.subr.mxu0 0.0
      %871 = vmatpush1.msra.mxu0 0.0
      %872 = vmatprep.subr.mxu0 0.0
      %873 = vmatpush1.msra.mxu0 0.0
      %874 = vmatprep.subr.mxu0 0.0
      %875 = vmatpush1.msra.mxu0 0.0
      %876 = vmatprep.subr.mxu0 0.0
      %877 = vmatpush1.msra.mxu0 0.0
      %878 = vmatprep.subr.mxu0 0.0
      %879 = vmatpush1.msra.mxu0 0.0
      %880 = vmatprep.subr.mxu0 0.0
      %881 = vmatpush1.msra.mxu0 0.0
      %882 = vmatprep.subr.mxu0 0.0
      %883 = vmatpush1.msra.mxu0 0.0
      %884 = vmatprep.subr.mxu0 0.0
      %885 = vmatpush1.msra.mxu0 0.0
      %886 = vmatprep.subr.mxu0 0.0
      %887 = vmatpush1.msra.mxu0 0.0
      %888 = vmatprep.subr.mxu0 0.0
      %889 = vmatpush1.msra.mxu0 0.0
      %890 = vmatprep.subr.mxu0 0.0
      %891 = vmatpush1.msra.mxu0 0.0
      %892 = vmatprep.subr.mxu0 0.0
      %893 = vmatpush1.msra.mxu0 0.0
      %894 = vmatprep.mubr.f32.mxu0 0.0
      %895 = vmatmul.mubr.f32.gmra.mrb[0].mxu0 %v825
      %v896 = vpop.f32.mrb[0].mxu0
      %v897 = vadd.f32 0.0, %v896
      %v898 = vpop.f32.mrb[0].mxu0
      %899 = vmatprep.mubr.f32.mxu0 0.0
      %900 = vmatmul.mubr.f32.gmra.mrb[0].mxu0 %v828
      %v901 = vpop.f32.mrb[0].mxu0
      %v902 = vadd.f32 0.0, %v901
      %v903 = vpop.f32.mrb[0].mxu0
      %904 = vdwg.mxu0
      %v906 = vsel %vm361, %v660, 0
      %v909 = vsel %vm361, %v661, 0
      %911 = vmatprep.subr.mxu0 0.0
      %912 = vmatpush1.msra.mxu0 %v651
      %913 = vmatprep.subr.mxu0 0.0
      %914 = vmatpush1.msra.mxu0 0.0
      %915 = vmatprep.subr.mxu0 0.0
      %916 = vmatpush1.msra.mxu0 0.0
      %917 = vmatprep.subr.mxu0 0.0
      %918 = vmatpush1.msra.mxu0 0.0
      %919 = vmatprep.subr.mxu0 0.0
      %920 = vmatpush1.msra.mxu0 0.0
      %921 = vmatprep.subr.mxu0 0.0
      %922 = vmatpush1.msra.mxu0 0.0
      %923 = vmatprep.subr.mxu0 0.0
      %924 = vmatpush1.msra.mxu0 0.0
      %925 = vmatprep.subr.mxu0 0.0
      %926 = vmatpush1.msra.mxu0 0.0
      %927 = vmatprep.subr.mxu0 0.0
      %928 = vmatpush1.msra.mxu0 0.0
      %929 = vmatprep.subr.mxu0 0.0
      %930 = vmatpush1.msra.mxu0 0.0
      %931 = vmatprep.subr.mxu0 0.0
      %932 = vmatpush1.msra.mxu0 0.0
      %933 = vmatprep.subr.mxu0 0.0
      %934 = vmatpush1.msra.mxu0 0.0
      %935 = vmatprep.subr.mxu0 0.0
      %936 = vmatpush1.msra.mxu0 0.0
      %937 = vmatprep.subr.mxu0 0.0
      %938 = vmatpush1.msra.mxu0 0.0
      %939 = vmatprep.subr.mxu0 0.0
      %940 = vmatpush1.msra.mxu0 0.0
      %941 = vmatprep.subr.mxu0 0.0
      %942 = vmatpush1.msra.mxu0 0.0
      %943 = vmatprep.subr.mxu0 0.0
      %944 = vmatpush1.msra.mxu0 0.0
      %945 = vmatprep.subr.mxu0 0.0
      %946 = vmatpush1.msra.mxu0 0.0
      %947 = vmatprep.subr.mxu0 0.0
      %948 = vmatpush1.msra.mxu0 0.0
      %949 = vmatprep.subr.mxu0 0.0
      %950 = vmatpush1.msra.mxu0 0.0
      %951 = vmatprep.subr.mxu0 0.0
      %952 = vmatpush1.msra.mxu0 0.0
      %953 = vmatprep.subr.mxu0 0.0
      %954 = vmatpush1.msra.mxu0 0.0
      %955 = vmatprep.subr.mxu0 0.0
      %956 = vmatpush1.msra.mxu0 0.0
      %957 = vmatprep.subr.mxu0 0.0
      %958 = vmatpush1.msra.mxu0 0.0
      %959 = vmatprep.subr.mxu0 0.0
      %960 = vmatpush1.msra.mxu0 0.0
      %961 = vmatprep.subr.mxu0 0.0
      %962 = vmatpush1.msra.mxu0 0.0
      %963 = vmatprep.subr.mxu0 0.0
      %964 = vmatpush1.msra.mxu0 0.0
      %965 = vmatprep.subr.mxu0 0.0
      %966 = vmatpush1.msra.mxu0 0.0
      %967 = vmatprep.subr.mxu0 0.0
      %968 = vmatpush1.msra.mxu0 0.0
      %969 = vmatprep.subr.mxu0 0.0
      %970 = vmatpush1.msra.mxu0 0.0
      %971 = vmatprep.subr.mxu0 0.0
      %972 = vmatpush1.msra.mxu0 0.0
      %973 = vmatprep.subr.mxu0 0.0
      %974 = vmatpush1.msra.mxu0 0.0
      %975 = vmatprep.mubr.f32.mxu0 0.0
      %976 = vmatmul.mubr.f32.gmra.mrb[0].mxu0 %v906
      %v977 = vpop.f32.mrb[0].mxu0
      %v978 = vadd.f32 0.0, %v977
      %v979 = vpop.f32.mrb[0].mxu0
      %980 = vmatprep.mubr.f32.mxu0 0.0
      %981 = vmatmul.mubr.f32.gmra.mrb[0].mxu0 %v909
      %v982 = vpop.f32.mrb[0].mxu0
      %v983 = vadd.f32 0.0, %v982
      %v984 = vpop.f32.mrb[0].mxu0
      %985 = vdwg.mxu0
      %vm986 = vcmask 134144
      %987 = vst.msk [vmem:[#allocation2] sm:$0xf] %vm986, 0.0
      %vm988 = vcmask 1043592
      %989 = vst.msk [vmem:[#allocation2 + $0x8] sm:$0xf] %vm988, 0.0
      %v994 = vrot.slane %v816, 7
      %vm995 = vcmask 1041409
      %v996 = vsel %vm995, %v994, %v735
      %vm997 = vcmask 1045509
      %v998 = vsel %vm997, %v994, %v996
      %v999 = vrot.slane %v897, 6
      %vm1000 = vcmask 1042434
      %v1001 = vsel %vm1000, %v999, %v998
      %vm1002 = vcmask 1046534
      %v1003 = vsel %vm1002, %v999, %v1001
      %v1004 = vrot.slane %v978, 5
      %vm1005 = vcmask 1043459
      %v1006 = vsel %vm1005, %v1004, %v1003
      %vm1007 = vcmask 1047559
      %v1008 = vsel %vm1007, %v1004, %v1006
      %1009 = vrot.lane.b32.xlu0 %v1008, 17
      %v1010 = vpop.permute.xlu0 %1009
      %vm1012 = vcmask 265352
      %1013 = vst.msk [vmem:[#allocation2] sm:$0xf] %vm1012, %v1010
      %v1014 = vrot.slane %v735, 1
      %v1015 = vsel %vm995, %v816, %v1014
      %v1016 = vsel %vm997, %v816, %v1015
      %v1017 = vrot.slane %v897, 7
      %v1018 = vsel %vm1000, %v1017, %v1016
      %v1019 = vsel %vm1002, %v1017, %v1018
      %v1020 = vrot.slane %v978, 6
      %v1021 = vsel %vm1005, %v1020, %v1019
      %v1022 = vsel %vm1007, %v1020, %v1021
      %1023 = vrot.lane.b32.xlu0 %v1022, 33
      %v1024 = vpop.permute.xlu0 %1023
      %vm1026 = vcmask 396552
      %1027 = vst.msk [vmem:[#allocation2] sm:$0xf] %vm1026, %v1024
      %v1028 = vrot.slane %v735, 2
      %v1029 = vrot.slane %v816, 1
      %v1030 = vsel %vm995, %v1029, %v1028
      %v1031 = vsel %vm997, %v1029, %v1030
      %v1032 = vsel %vm1000, %v897, %v1031
      %v1033 = vsel %vm1002, %v897, %v1032
      %v1034 = vrot.slane %v978, 7
      %v1035 = vsel %vm1005, %v1034, %v1033
      %v1036 = vsel %vm1007, %v1034, %v1035
      %1037 = vrot.lane.b32.xlu0 %v1036, 49
      %v1038 = vpop.permute.xlu0 %1037
      %vm1040 = vcmask 527752
      %1041 = vst.msk [vmem:[#allocation2] sm:$0xf] %vm1040, %v1038
      %v1042 = vrot.slane %v735, 3
      %v1043 = vrot.slane %v816, 2
      %v1044 = vsel %vm995, %v1043, %v1042
      %v1045 = vsel %vm997, %v1043, %v1044
      %v1046 = vrot.slane %v897, 1
      %v1047 = vsel %vm1000, %v1046, %v1045
      %v1048 = vsel %vm1002, %v1046, %v1047
      %v1049 = vsel %vm1005, %v978, %v1048
      %v1050 = vsel %vm1007, %v978, %v1049
      %1051 = vrot.lane.b32.xlu0 %v1050, 65
      %v1052 = vpop.permute.xlu0 %1051
      %vm1054 = vcmask 658952
      %1055 = vst.msk [vmem:[#allocation2] sm:$0xf] %vm1054, %v1052
      %v1056 = vcombine.high %v735, %v735
      %v1057 = vcombine.high %v816, %v816
      %v1058 = vcombine.high %v897, %v897
      %v1059 = vcombine.high %v978, %v978
      %v1060 = vrot.slane %v1057, 7
      %v1061 = vsel %vm995, %v1060, %v1056
      %v1062 = vsel %vm997, %v1060, %v1061
      %v1063 = vrot.slane %v1058, 6
      %v1064 = vsel %vm1000, %v1063, %v1062
      %v1065 = vsel %vm1002, %v1063, %v1064
      %v1066 = vrot.slane %v1059, 5
      %v1067 = vsel %vm1005, %v1066, %v1065
      %v1068 = vsel %vm1007, %v1066, %v1067
      %1069 = vrot.lane.b32.xlu0 %v1068, 81
      %v1070 = vpop.permute.xlu0 %1069
      %vm1072 = vcmask 790152
      %1073 = vst.msk [vmem:[#allocation2] sm:$0xf] %vm1072, %v1070
      %v1074 = vrot.slane %v1056, 1
      %v1075 = vsel %vm995, %v1057, %v1074
      %v1076 = vsel %vm997, %v1057, %v1075
      %v1077 = vrot.slane %v1058, 7
      %v1078 = vsel %vm1000, %v1077, %v1076
      %v1079 = vsel %vm1002, %v1077, %v1078
      %v1080 = vrot.slane %v1059, 6
      %v1081 = vsel %vm1005, %v1080, %v1079
      %v1082 = vsel %vm1007, %v1080, %v1081
      %1083 = vrot.lane.b32.xlu0 %v1082, 97
      %v1084 = vpop.permute.xlu0 %1083
      %vm1086 = vcmask 921352
      %1087 = vst.msk [vmem:[#allocation2] sm:$0xf] %vm1086, %v1084
      %v1088 = vrot.slane %v1056, 2
      %v1089 = vrot.slane %v1057, 1
      %v1090 = vsel %vm995, %v1089, %v1088
      %v1091 = vsel %vm997, %v1089, %v1090
      %v1092 = vsel %vm1000, %v1058, %v1091
      %v1093 = vsel %vm1002, %v1058, %v1092
      %v1094 = vrot.slane %v1059, 7
      %v1095 = vsel %vm1005, %v1094, %v1093
      %v1096 = vsel %vm1007, %v1094, %v1095
      %1097 = vrot.lane.b32.xlu0 %v1096, 113
      %v1098 = vpop.permute.xlu0 %1097
      %v1099 = vrot.slane %v1098, 4
      %vm1100 = vcmask 924672
      %v1101 = vsel %vm1100, %v1099, %v1098
      %vm1103 = vcmask 1044360
      %vm1104 = vcmask 7172
      %vm1105 = vmor %vm1104, %vm1103
      %1106 = vst.msk [vmem:[#allocation2] sm:$0xff] %vm1105, %v1101
      %v1107 = vrot.slane %v1056, 3
      %v1108 = vrot.slane %v1057, 2
      %v1109 = vsel %vm995, %v1108, %v1107
      %v1110 = vsel %vm997, %v1108, %v1109
      %v1111 = vrot.slane %v1058, 1
      %v1112 = vsel %vm1000, %v1111, %v1110
      %v1113 = vsel %vm1002, %v1111, %v1112
      %v1114 = vsel %vm1005, %v1059, %v1113
      %v1115 = vsel %vm1007, %v1059, %v1114
      %1116 = vrot.lane.b32.xlu0 %v1115, 1
      %v1117 = vpop.permute.xlu0 %1116
      %vm1119 = vcmask 134152
      %1120 = vst.msk [vmem:[#allocation2 + $0x4] sm:$0xf] %vm1119, %v1117
      %v1125 = vrot.slane %v821, 7
      %v1126 = vsel %vm995, %v1125, %v740
      %v1127 = vsel %vm997, %v1125, %v1126
      %v1128 = vrot.slane %v902, 6
      %v1129 = vsel %vm1000, %v1128, %v1127
      %v1130 = vsel %vm1002, %v1128, %v1129
      %v1131 = vrot.slane %v983, 5
      %v1132 = vsel %vm1005, %v1131, %v1130
      %v1133 = vsel %vm1007, %v1131, %v1132
      %1134 = vrot.lane.b32.xlu0 %v1133, 17
      %v1135 = vpop.permute.xlu0 %1134
      %1137 = vst.msk [vmem:[#allocation2 + $0x4] sm:$0xf] %vm1012, %v1135
      %v1138 = vrot.slane %v740, 1
      %v1139 = vsel %vm995, %v821, %v1138
      %v1140 = vsel %vm997, %v821, %v1139
      %v1141 = vrot.slane %v902, 7
      %v1142 = vsel %vm1000, %v1141, %v1140
      %v1143 = vsel %vm1002, %v1141, %v1142
      %v1144 = vrot.slane %v983, 6
      %v1145 = vsel %vm1005, %v1144, %v1143
      %v1146 = vsel %vm1007, %v1144, %v1145
      %1147 = vrot.lane.b32.xlu0 %v1146, 33
      %v1148 = vpop.permute.xlu0 %1147
      %1150 = vst.msk [vmem:[#allocation2 + $0x4] sm:$0xf] %vm1026, %v1148
      %v1151 = vrot.slane %v740, 2
      %v1152 = vrot.slane %v821, 1
      %v1153 = vsel %vm995, %v1152, %v1151
      %v1154 = vsel %vm997, %v1152, %v1153
      %v1155 = vsel %vm1000, %v902, %v1154
      %v1156 = vsel %vm1002, %v902, %v1155
      %v1157 = vrot.slane %v983, 7
      %v1158 = vsel %vm1005, %v1157, %v1156
      %v1159 = vsel %vm1007, %v1157, %v1158
      %1160 = vrot.lane.b32.xlu0 %v1159, 49
      %v1161 = vpop.permute.xlu0 %1160
      %1163 = vst.msk [vmem:[#allocation2 + $0x4] sm:$0xf] %vm1040, %v1161
      %v1164 = vrot.slane %v740, 3
      %v1165 = vrot.slane %v821, 2
      %v1166 = vsel %vm995, %v1165, %v1164
      %v1167 = vsel %vm997, %v1165, %v1166
      %v1168 = vrot.slane %v902, 1
      %v1169 = vsel %vm1000, %v1168, %v1167
      %v1170 = vsel %vm1002, %v1168, %v1169
      %v1171 = vsel %vm1005, %v983, %v1170
      %v1172 = vsel %vm1007, %v983, %v1171
      %1173 = vrot.lane.b32.xlu0 %v1172, 65
      %v1174 = vpop.permute.xlu0 %1173
      %1176 = vst.msk [vmem:[#allocation2 + $0x4] sm:$0xf] %vm1054, %v1174
      %v1177 = vcombine.high %v740, %v740
      %v1178 = vcombine.high %v821, %v821
      %v1179 = vcombine.high %v902, %v902
      %v1180 = vcombine.high %v983, %v983
      %v1181 = vrot.slane %v1178, 7
      %v1182 = vsel %vm995, %v1181, %v1177
      %v1183 = vsel %vm997, %v1181, %v1182
      %v1184 = vrot.slane %v1179, 6
      %v1185 = vsel %vm1000, %v1184, %v1183
      %v1186 = vsel %vm1002, %v1184, %v1185
      %v1187 = vrot.slane %v1180, 5
      %v1188 = vsel %vm1005, %v1187, %v1186
      %v1189 = vsel %vm1007, %v1187, %v1188
      %1190 = vrot.lane.b32.xlu0 %v1189, 81
      %v1191 = vpop.permute.xlu0 %1190
      %1193 = vst.msk [vmem:[#allocation2 + $0x4] sm:$0xf] %vm1072, %v1191
      %v1194 = vrot.slane %v1177, 1
      %v1195 = vsel %vm995, %v1178, %v1194
      %v1196 = vsel %vm997, %v1178, %v1195
      %v1197 = vrot.slane %v1179, 7
      %v1198 = vsel %vm1000, %v1197, %v1196
      %v1199 = vsel %vm1002, %v1197, %v1198
      %v1200 = vrot.slane %v1180, 6
      %v1201 = vsel %vm1005, %v1200, %v1199
      %v1202 = vsel %vm1007, %v1200, %v1201
      %1203 = vrot.lane.b32.xlu0 %v1202, 97
      %v1204 = vpop.permute.xlu0 %1203
      %1206 = vst.msk [vmem:[#allocation2 + $0x4] sm:$0xf] %vm1086, %v1204
      %v1207 = vrot.slane %v1177, 2
      %v1208 = vrot.slane %v1178, 1
      %v1209 = vsel %vm995, %v1208, %v1207
      %v1210 = vsel %vm997, %v1208, %v1209
      %v1211 = vsel %vm1000, %v1179, %v1210
      %v1212 = vsel %vm1002, %v1179, %v1211
      %v1213 = vrot.slane %v1180, 7
      %v1214 = vsel %vm1005, %v1213, %v1212
      %v1215 = vsel %vm1007, %v1213, %v1214
      %1216 = vrot.lane.b32.xlu0 %v1215, 113
      %v1217 = vpop.permute.xlu0 %1216
      %v1218 = vrot.slane %v1217, 4
      %v1219 = vsel %vm1100, %v1218, %v1217
      %1221 = vst.msk [vmem:[#allocation2 + $0x4] sm:$0xff] %vm1105, %v1219
      %v1222 = vrot.slane %v1177, 3
      %v1223 = vrot.slane %v1178, 2
      %v1224 = vsel %vm995, %v1223, %v1222
      %v1225 = vsel %vm997, %v1223, %v1224
      %v1226 = vrot.slane %v1179, 1
      %v1227 = vsel %vm1000, %v1226, %v1225
      %v1228 = vsel %vm1002, %v1226, %v1227
      %v1229 = vsel %vm1005, %v1180, %v1228
      %v1230 = vsel %vm1007, %v1180, %v1229
      %1231 = vrot.lane.b32.xlu0 %v1230, 1
      %v1232 = vpop.permute.xlu0 %1231
      %1234 = vst.msk [vmem:[#allocation2 + $0x8] sm:$0xf] %vm1119, %v1232
      %v1235 = vld [vmem:[%s8] ss:$2 sm:$0x3]
      %s1236 = scalar_lea.vmem %s8, 1
      %v1237 = vld [vmem:[%s1236] ss:$2 sm:$0x3]
      %v1238 = vld [vmem:[%s347] sm:$0xff]
      %v1239 = vld [vmem:[#allocation2] sm:$0xff]
      %v1241 = vlaneseq
      %v1242 = vshrl.u32 %v1241, 7
      %v1243 = vsub.s32 0, %v1242
      %v1244 = vrot.slane %v1235, %v1243
      %v1245 = vlaneseq
      %v1246 = vshrl.u32 %v1245, 7
      %v1247 = vsub.s32 1, %v1246
      %v1248 = vrot.slane %v1235, %v1247
      %v1249 = vcombine.low %v1244, %v1248
      %v1251 = vmul.f32 %v1238, %v1249
      %v1252 = vmul.f32 %v1239, %v1249
      %v1254 = vcombine.high %v1251, %v1251
      %1256 = vst [vmem:[#allocation3] sm:$0xf] %v1251
      %1257 = vst [vmem:[#allocation3 + $0x8] sm:$0xf] %v1254
      %v1259 = vcombine.low %v1252, %v1252
      %1261 = vst [vmem:[#allocation3] sm:$0xf0] %v1259
      %1262 = vst [vmem:[#allocation3 + $0x8] sm:$0xf0] %v1252
      %v1263 = vld [vmem:[%s347] sm:$0xff]
      %v1264 = vld [vmem:[%s347 + $0x8] sm:$0xf]
      %v1265 = vld [vmem:[#allocation2] sm:$0xff]
      %v1266 = vld [vmem:[#allocation2 + $0x8] sm:$0xf]
      %v1269 = vcombine.high %v1263, %v1263
      %1270 = vrot.lane.b32.xlu0 %v1263, 127
      %v1271 = vpop.permute.xlu0 %1270
      %1272 = vrot.lane.b32.xlu0 %v1269, 127
      %v1273 = vpop.permute.xlu0 %1272
      %1274 = vrot.lane.b32.xlu0 %v1264, 127
      %v1275 = vpop.permute.xlu0 %1274
      %vm1276 = vcmask 1039360
      %v1277 = vsel %vm1276, %v1271, %v1273
      %v1278 = vsel %vm1276, %v1273, %v1275
      %1281 = vst [vmem:[#allocation3 + $0x10] sm:$0xf] %v1277
      %1282 = vst [vmem:[#allocation3 + $0x18] sm:$0xf] %v1278
      %v1285 = vcombine.low %v1265, %v1265
      %v1286 = vcombine.low %v1266, %v1266
      %1287 = vrot.lane.b32.xlu0 %v1285, 127
      %v1288 = vpop.permute.xlu0 %1287
      %1289 = vrot.lane.b32.xlu0 %v1265, 127
      %v1290 = vpop.permute.xlu0 %1289
      %1291 = vrot.lane.b32.xlu0 %v1286, 127
      %v1292 = vpop.permute.xlu0 %1291
      %v1293 = vsel %vm1276, %v1288, %v1290
      %v1294 = vsel %vm1276, %v1290, %v1292
      %1297 = vst [vmem:[#allocation3 + $0x10] sm:$0xf0] %v1293
      %1298 = vst [vmem:[#allocation3 + $0x18] sm:$0xf0] %v1294
      %v1299 = vld [vmem:[%s347] sm:$0xff]
      %v1300 = vld [vmem:[%s347 + $0x8] sm:$0xf]
      %v1301 = vld [vmem:[#allocation2] sm:$0xff]
      %v1302 = vld [vmem:[#allocation2 + $0x8] sm:$0xf]
      %v1304 = vlaneseq
      %v1305 = vshrl.u32 %v1304, 7
      %v1306 = vsub.s32 0, %v1305
      %v1307 = vrot.slane %v1237, %v1306
      %v1308 = vlaneseq
      %v1309 = vshrl.u32 %v1308, 7
      %v1310 = vsub.s32 1, %v1309
      %v1311 = vrot.slane %v1237, %v1310
      %v1312 = vcombine.low %v1307, %v1311
      %1313 = vrot.lane.b32.xlu0 %v1312, 2
      %v1314 = vpop.permute.xlu0 %1313
      %v1315 = vrot.slane %v1314, 4
      %vm1316 = vcmask 15360
      %v1317 = vsel %vm1316, %v1315, %v1314
      %v1320 = vmul.f32 %v1299, %v1317
      %v1321 = vmul.f32 %v1300, %v1315
      %v1322 = vmul.f32 %v1301, %v1317
      %v1323 = vmul.f32 %v1302, %v1315
      %v1326 = vcombine.high %v1320, %v1320
      %1327 = vrot.lane.b32.xlu0 %v1320, 126
      %v1328 = vpop.permute.xlu0 %1327
      %1329 = vrot.lane.b32.xlu0 %v1326, 126
      %v1330 = vpop.permute.xlu0 %1329
      %1331 = vrot.lane.b32.xlu0 %v1321, 126
      %v1332 = vpop.permute.xlu0 %1331
      %vm1333 = vcmask 1031168
      %v1334 = vsel %vm1333, %v1328, %v1330
      %v1335 = vsel %vm1333, %v1330, %v1332
      %1338 = vst [vmem:[#allocation3 + $0x20] sm:$0xf] %v1334
      %1339 = vst [vmem:[#allocation3 + $0x28] sm:$0xf] %v1335
      %v1342 = vcombine.low %v1322, %v1322
      %v1343 = vcombine.low %v1323, %v1323
      %1344 = vrot.lane.b32.xlu0 %v1342, 126
      %v1345 = vpop.permute.xlu0 %1344
      %1346 = vrot.lane.b32.xlu0 %v1322, 126
      %v1347 = vpop.permute.xlu0 %1346
      %1348 = vrot.lane.b32.xlu0 %v1343, 126
      %v1349 = vpop.permute.xlu0 %1348
      %v1350 = vsel %vm1333, %v1345, %v1347
      %v1351 = vsel %vm1333, %v1347, %v1349
      %1354 = vst [vmem:[#allocation3 + $0x20] sm:$0xf0] %v1350
      %1355 = vst [vmem:[#allocation3 + $0x28] sm:$0xf0] %v1351
      %v1356 = vld [vmem:[%s347] sm:$0xff]
      %v1357 = vld [vmem:[%s347 + $0x8] sm:$0xf]
      %v1358 = vld [vmem:[#allocation2] sm:$0xff]
      %v1359 = vld [vmem:[#allocation2 + $0x8] sm:$0xf]
      %1360 = vrot.lane.b32.xlu0 %v1249, 16
      %v1361 = vpop.permute.xlu0 %1360
      %v1362 = vrot.slane %v1361, 4
      %vm1363 = vcmask 130048
      %v1364 = vsel %vm1363, %v1362, %v1361
      %v1367 = vmul.f32 %v1356, %v1364
      %v1368 = vmul.f32 %v1357, %v1362
      %v1369 = vmul.f32 %v1358, %v1364
      %v1370 = vmul.f32 %v1359, %v1362
      %v1373 = vcombine.high %v1367, %v1367
      %1374 = vrot.lane.b32.xlu0 %v1367, 112
      %v1375 = vpop.permute.xlu0 %1374
      %1376 = vrot.lane.b32.xlu0 %v1373, 112
      %v1377 = vpop.permute.xlu0 %1376
      %1378 = vrot.lane.b32.xlu0 %v1368, 112
      %v1379 = vpop.permute.xlu0 %1378
      %vm1380 = vcmask 916480
      %v1381 = vsel %vm1380, %v1375, %v1377
      %v1382 = vsel %vm1380, %v1377, %v1379
      %1385 = vst [vmem:[#allocation3 + $0x30] sm:$0xf] %v1381
      %1386 = vst [vmem:[#allocation3 + $0x38] sm:$0xf] %v1382
      %v1389 = vcombine.low %v1369, %v1369
      %v1390 = vcombine.low %v1370, %v1370
      %1391 = vrot.lane.b32.xlu0 %v1389, 112
      %v1392 = vpop.permute.xlu0 %1391
      %1393 = vrot.lane.b32.xlu0 %v1369, 112
      %v1394 = vpop.permute.xlu0 %1393
      %1395 = vrot.lane.b32.xlu0 %v1390, 112
      %v1396 = vpop.permute.xlu0 %1395
      %v1397 = vsel %vm1380, %v1392, %v1394
      %v1398 = vsel %vm1380, %v1394, %v1396
      %1401 = vst [vmem:[#allocation3 + $0x30] sm:$0xf0] %v1397
      %1402 = vst [vmem:[#allocation3 + $0x38] sm:$0xf0] %v1398
      %v1403 = vld [vmem:[%s347] sm:$0xff]
      %v1404 = vld [vmem:[%s347 + $0x8] sm:$0xf]
      %v1405 = vld [vmem:[#allocation2] sm:$0xff]
      %v1406 = vld [vmem:[#allocation2 + $0x8] sm:$0xf]
      %v1409 = vcombine.high %v1403, %v1403
      %1410 = vrot.lane.b32.xlu0 %v1403, 111
      %v1411 = vpop.permute.xlu0 %1410
      %1412 = vrot.lane.b32.xlu0 %v1409, 111
      %v1413 = vpop.permute.xlu0 %1412
      %1414 = vrot.lane.b32.xlu0 %v1404, 111
      %v1415 = vpop.permute.xlu0 %1414
      %vm1416 = vcmask 908288
      %v1417 = vsel %vm1416, %v1411, %v1413
      %v1418 = vsel %vm1416, %v1413, %v1415
      %1421 = vst [vmem:[#allocation3 + $0x40] sm:$0xf] %v1417
      %1422 = vst [vmem:[#allocation3 + $0x48] sm:$0xf] %v1418
      %v1425 = vcombine.low %v1405, %v1405
      %v1426 = vcombine.low %v1406, %v1406
      %1427 = vrot.lane.b32.xlu0 %v1425, 111
      %v1428 = vpop.permute.xlu0 %1427
      %1429 = vrot.lane.b32.xlu0 %v1405, 111
      %v1430 = vpop.permute.xlu0 %1429
      %1431 = vrot.lane.b32.xlu0 %v1426, 111
      %v1432 = vpop.permute.xlu0 %1431
      %v1433 = vsel %vm1416, %v1428, %v1430
      %v1434 = vsel %vm1416, %v1430, %v1432
      %1437 = vst [vmem:[#allocation3 + $0x40] sm:$0xf0] %v1433
      %1438 = vst [vmem:[#allocation3 + $0x48] sm:$0xf0] %v1434
      %v1439 = vld [vmem:[%s347] sm:$0xff]
      %v1440 = vld [vmem:[%s347 + $0x8] sm:$0xf]
      %v1441 = vld [vmem:[#allocation2] sm:$0xff]
      %v1442 = vld [vmem:[#allocation2 + $0x8] sm:$0xf]
      %1443 = vrot.lane.b32.xlu0 %v1312, 18
      %v1444 = vpop.permute.xlu0 %1443
      %v1445 = vrot.slane %v1444, 4
      %vm1446 = vcmask 146432
      %v1447 = vsel %vm1446, %v1445, %v1444
      %v1450 = vmul.f32 %v1439, %v1447
      %v1451 = vmul.f32 %v1440, %v1445
      %v1452 = vmul.f32 %v1441, %v1447
      %v1453 = vmul.f32 %v1442, %v1445
      %v1456 = vcombine.high %v1450, %v1450
      %1457 = vrot.lane.b32.xlu0 %v1450, 110
      %v1458 = vpop.permute.xlu0 %1457
      %1459 = vrot.lane.b32.xlu0 %v1456, 110
      %v1460 = vpop.permute.xlu0 %1459
      %1461 = vrot.lane.b32.xlu0 %v1451, 110
      %v1462 = vpop.permute.xlu0 %1461
      %vm1463 = vcmask 900096
      %v1464 = vsel %vm1463, %v1458, %v1460
      %v1465 = vsel %vm1463, %v1460, %v1462
      %1468 = vst [vmem:[#allocation3 + $0x50] sm:$0xf] %v1464
      %1469 = vst [vmem:[#allocation3 + $0x58] sm:$0xf] %v1465
      %v1472 = vcombine.low %v1452, %v1452
      %v1473 = vcombine.low %v1453, %v1453
      %1474 = vrot.lane.b32.xlu0 %v1472, 110
      %v1475 = vpop.permute.xlu0 %1474
      %1476 = vrot.lane.b32.xlu0 %v1452, 110
      %v1477 = vpop.permute.xlu0 %1476
      %1478 = vrot.lane.b32.xlu0 %v1473, 110
      %v1479 = vpop.permute.xlu0 %1478
      %v1480 = vsel %vm1463, %v1475, %v1477
      %v1481 = vsel %vm1463, %v1477, %v1479
      %1484 = vst [vmem:[#allocation3 + $0x50] sm:$0xf0] %v1480
      %1485 = vst [vmem:[#allocation3 + $0x58] sm:$0xf0] %v1481
      %v1486 = vld [vmem:[%s347] sm:$0xff]
      %v1487 = vld [vmem:[%s347 + $0x8] sm:$0xf]
      %v1488 = vld [vmem:[#allocation2] sm:$0xff]
      %v1489 = vld [vmem:[#allocation2 + $0x8] sm:$0xf]
      %1490 = vrot.lane.b32.xlu0 %v1249, 32
      %v1491 = vpop.permute.xlu0 %1490
      %v1492 = vrot.slane %v1491, 4
      %vm1493 = vcmask 261120
      %v1494 = vsel %vm1493, %v1492, %v1491
      %v1497 = vmul.f32 %v1486, %v1494
      %v1498 = vmul.f32 %v1487, %v1492
      %v1499 = vmul.f32 %v1488, %v1494
      %v1500 = vmul.f32 %v1489, %v1492
      %v1503 = vcombine.high %v1497, %v1497
      %1504 = vrot.lane.b32.xlu0 %v1497, 96
      %v1505 = vpop.permute.xlu0 %1504
      %1506 = vrot.lane.b32.xlu0 %v1503, 96
      %v1507 = vpop.permute.xlu0 %1506
      %1508 = vrot.lane.b32.xlu0 %v1498, 96
      %v1509 = vpop.permute.xlu0 %1508
      %vm1510 = vcmask 785408
      %v1511 = vsel %vm1510, %v1505, %v1507
      %v1512 = vsel %vm1510, %v1507, %v1509
      %1515 = vst [vmem:[#allocation3 + $0x60] sm:$0xf] %v1511
      %1516 = vst [vmem:[#allocation3 + $0x68] sm:$0xf] %v1512
      %v1519 = vcombine.low %v1499, %v1499
      %v1520 = vcombine.low %v1500, %v1500
      %1521 = vrot.lane.b32.xlu0 %v1519, 96
      %v1522 = vpop.permute.xlu0 %1521
      %1523 = vrot.lane.b32.xlu0 %v1499, 96
      %v1524 = vpop.permute.xlu0 %1523
      %1525 = vrot.lane.b32.xlu0 %v1520, 96
      %v1526 = vpop.permute.xlu0 %1525
      %v1527 = vsel %vm1510, %v1522, %v1524
      %v1528 = vsel %vm1510, %v1524, %v1526
      %1531 = vst [vmem:[#allocation3 + $0x60] sm:$0xf0] %v1527
      %1532 = vst [vmem:[#allocation3 + $0x68] sm:$0xf0] %v1528
      %v1533 = vld [vmem:[%s347] sm:$0xff]
      %v1534 = vld [vmem:[%s347 + $0x8] sm:$0xf]
      %v1535 = vld [vmem:[#allocation2] sm:$0xff]
      %v1536 = vld [vmem:[#allocation2 + $0x8] sm:$0xf]
      %v1539 = vcombine.high %v1533, %v1533
      %1540 = vrot.lane.b32.xlu0 %v1533, 95
      %v1541 = vpop.permute.xlu0 %1540
      %1542 = vrot.lane.b32.xlu0 %v1539, 95
      %v1543 = vpop.permute.xlu0 %1542
      %1544 = vrot.lane.b32.xlu0 %v1534, 95
      %v1545 = vpop.permute.xlu0 %1544
      %vm1546 = vcmask 777216
      %v1547 = vsel %vm1546, %v1541, %v1543
      %v1548 = vsel %vm1546, %v1543, %v1545
      %1551 = vst [vmem:[#allocation3 + $0x70] sm:$0xf] %v1547
      %1552 = vst [vmem:[#allocation3 + $0x78] sm:$0xf] %v1548
      %v1555 = vcombine.low %v1535, %v1535
      %v1556 = vcombine.low %v1536, %v1536
      %1557 = vrot.lane.b32.xlu0 %v1555, 95
      %v1558 = vpop.permute.xlu0 %1557
      %1559 = vrot.lane.b32.xlu0 %v1535, 95
      %v1560 = vpop.permute.xlu0 %1559
      %1561 = vrot.lane.b32.xlu0 %v1556, 95
      %v1562 = vpop.permute.xlu0 %1561
      %v1563 = vsel %vm1546, %v1558, %v1560
      %v1564 = vsel %vm1546, %v1560, %v1562
      %1567 = vst [vmem:[#allocation3 + $0x70] sm:$0xf0] %v1563
      %1568 = vst [vmem:[#allocation3 + $0x78] sm:$0xf0] %v1564
      %v1569 = vld [vmem:[%s347] sm:$0xff]
      %v1570 = vld [vmem:[%s347 + $0x8] sm:$0xf]
      %v1571 = vld [vmem:[#allocation2] sm:$0xff]
      %v1572 = vld [vmem:[#allocation2 + $0x8] sm:$0xf]
      %1573 = vrot.lane.b32.xlu0 %v1312, 34
      %v1574 = vpop.permute.xlu0 %1573
      %v1575 = vrot.slane %v1574, 4
      %vm1576 = vcmask 277504
      %v1577 = vsel %vm1576, %v1575, %v1574
      %v1580 = vmul.f32 %v1569, %v1577
      %v1581 = vmul.f32 %v1570, %v1575
      %v1582 = vmul.f32 %v1571, %v1577
      %v1583 = vmul.f32 %v1572, %v1575
      %v1586 = vcombine.high %v1580, %v1580
      %1587 = vrot.lane.b32.xlu0 %v1580, 94
      %v1588 = vpop.permute.xlu0 %1587
      %1589 = vrot.lane.b32.xlu0 %v1586, 94
      %v1590 = vpop.permute.xlu0 %1589
      %1591 = vrot.lane.b32.xlu0 %v1581, 94
      %v1592 = vpop.permute.xlu0 %1591
      %vm1593 = vcmask 769024
      %v1594 = vsel %vm1593, %v1588, %v1590
      %v1595 = vsel %vm1593, %v1590, %v1592
      %1598 = vst [vmem:[#allocation3 + $0x80] sm:$0xf] %v1594
      %1599 = vst [vmem:[#allocation3 + $0x88] sm:$0xf] %v1595
      %v1602 = vcombine.low %v1582, %v1582
      %v1603 = vcombine.low %v1583, %v1583
      %1604 = vrot.lane.b32.xlu0 %v1602, 94
      %v1605 = vpop.permute.xlu0 %1604
      %1606 = vrot.lane.b32.xlu0 %v1582, 94
      %v1607 = vpop.permute.xlu0 %1606
      %1608 = vrot.lane.b32.xlu0 %v1603, 94
      %v1609 = vpop.permute.xlu0 %1608
      %v1610 = vsel %vm1593, %v1605, %v1607
      %v1611 = vsel %vm1593, %v1607, %v1609
      %1614 = vst [vmem:[#allocation3 + $0x80] sm:$0xf0] %v1610
      %1615 = vst [vmem:[#allocation3 + $0x88] sm:$0xf0] %v1611
      %v1616 = vld [vmem:[%s4] sm:$0xf]
      %v1617 = vld [vmem:[#allocation3] sm:$0xff]
      %v1618 = vld [vmem:[#allocation3 + $0x8] sm:$0xff]
      %v1619 = vld [vmem:[#allocation3 + $0x10] sm:$0xff]
      %v1620 = vld [vmem:[#allocation3 + $0x18] sm:$0xff]
      %v1621 = vld [vmem:[#allocation3 + $0x20] sm:$0xff]
      %v1622 = vld [vmem:[#allocation3 + $0x28] sm:$0xff]
      %v1623 = vld [vmem:[#allocation3 + $0x30] sm:$0xff]
      %v1624 = vld [vmem:[#allocation3 + $0x38] sm:$0xff]
      %v1625 = vld [vmem:[#allocation3 + $0x40] sm:$0xff]
      %v1626 = vld [vmem:[#allocation3 + $0x48] sm:$0xff]
      %v1627 = vld [vmem:[#allocation3 + $0x50] sm:$0xff]
      %v1628 = vld [vmem:[#allocation3 + $0x58] sm:$0xff]
      %v1629 = vld [vmem:[#allocation3 + $0x60] sm:$0xff]
      %v1630 = vld [vmem:[#allocation3 + $0x68] sm:$0xff]
      %v1631 = vld [vmem:[#allocation3 + $0x70] sm:$0xff]
      %v1632 = vld [vmem:[#allocation3 + $0x78] sm:$0xff]
      %v1633 = vld [vmem:[#allocation3 + $0x80] sm:$0xff]
      %v1634 = vld [vmem:[#allocation3 + $0x88] sm:$0xff]
      %v1635 = vld [vmem:[%s5] sm:$0xf]
      %1637 = vset.pattern.permute.xlu0 0
      %1638 = vperm.xlu0 %1637, %v1635
      %v1639 = vpop.permute.xlu0 %1638
      %vm1641 = vcmask 588800
      %v1643 = vsel %vm1641, %v1616, 0
      %1645 = vmatprep.subr.mxu0 %v1618
      %1646 = vmatpush1.msra.mxu0 %v1617
      %1647 = vmatprep.subr.mxu0 %v1620
      %1648 = vmatpush1.msra.mxu0 %v1619
      %1649 = vmatprep.subr.mxu0 %v1622
      %1650 = vmatpush1.msra.mxu0 %v1621
      %1651 = vmatprep.subr.mxu0 %v1624
      %1652 = vmatpush1.msra.mxu0 %v1623
      %1653 = vmatprep.subr.mxu0 %v1626
      %1654 = vmatpush1.msra.mxu0 %v1625
      %1655 = vmatprep.subr.mxu0 %v1628
      %1656 = vmatpush1.msra.mxu0 %v1627
      %1657 = vmatprep.subr.mxu0 %v1630
      %1658 = vmatpush1.msra.mxu0 %v1629
      %1659 = vmatprep.subr.mxu0 %v1632
      %1660 = vmatpush1.msra.mxu0 %v1631
      %1661 = vmatprep.subr.mxu0 %v1634
      %1662 = vmatpush1.msra.mxu0 %v1633
      %1663 = vmatprep.subr.mxu0 0.0
      %1664 = vmatpush1.msra.mxu0 0.0
      %1665 = vmatprep.subr.mxu0 0.0
      %1666 = vmatpush1.msra.mxu0 0.0
      %1667 = vmatprep.subr.mxu0 0.0
      %1668 = vmatpush1.msra.mxu0 0.0
      %1669 = vmatprep.subr.mxu0 0.0
      %1670 = vmatpush1.msra.mxu0 0.0
      %1671 = vmatprep.subr.mxu0 0.0
      %1672 = vmatpush1.msra.mxu0 0.0
      %1673 = vmatprep.subr.mxu0 0.0
      %1674 = vmatpush1.msra.mxu0 0.0
      %1675 = vmatprep.subr.mxu0 0.0
      %1676 = vmatpush1.msra.mxu0 0.0
      %1677 = vmatprep.subr.mxu0 0.0
      %1678 = vmatpush1.msra.mxu0 0.0
      %1679 = vmatprep.subr.mxu0 0.0
      %1680 = vmatpush1.msra.mxu0 0.0
      %1681 = vmatprep.subr.mxu0 0.0
      %1682 = vmatpush1.msra.mxu0 0.0
      %1683 = vmatprep.subr.mxu0 0.0
      %1684 = vmatpush1.msra.mxu0 0.0
      %1685 = vmatprep.subr.mxu0 0.0
      %1686 = vmatpush1.msra.mxu0 0.0
      %1687 = vmatprep.subr.mxu0 0.0
      %1688 = vmatpush1.msra.mxu0 0.0
      %1689 = vmatprep.subr.mxu0 0.0
      %1690 = vmatpush1.msra.mxu0 0.0
      %1691 = vmatprep.subr.mxu0 0.0
      %1692 = vmatpush1.msra.mxu0 0.0
      %1693 = vmatprep.subr.mxu0 0.0
      %1694 = vmatpush1.msra.mxu0 0.0
      %1695 = vmatprep.subr.mxu0 0.0
      %1696 = vmatpush1.msra.mxu0 0.0
      %1697 = vmatprep.subr.mxu0 0.0
      %1698 = vmatpush1.msra.mxu0 0.0
      %1699 = vmatprep.subr.mxu0 0.0
      %1700 = vmatpush1.msra.mxu0 0.0
      %1701 = vmatprep.subr.mxu0 0.0
      %1702 = vmatpush1.msra.mxu0 0.0
      %1703 = vmatprep.subr.mxu0 0.0
      %1704 = vmatpush1.msra.mxu0 0.0
      %1705 = vmatprep.subr.mxu0 0.0
      %1706 = vmatpush1.msra.mxu0 0.0
      %1707 = vmatprep.subr.mxu0 0.0
      %1708 = vmatpush1.msra.mxu0 0.0
      %1709 = vmatprep.mubr.f32.mxu0 0.0
      %1710 = vmatmul.mubr.f32.gmra.mrb[0].mxu0 %v1643
      %v1711 = vpop.f32.mrb[0].mxu0
      %v1712 = vadd.f32 %v1639, %v1711
      %v1713 = vpop.f32.mrb[0].mxu0
      %v1714 = vadd.f32 %v1639, %v1713
      %1715 = vdwg.mxu0
      %v1716 = vmax.f32 %v1712, 0.0
      %v1717 = vmax.f32 %v1714, 0.0
      %1718 = vst.msk [vmem:[#allocation4] sm:$0xf] %vm986, 0.0
      %1719 = vst.msk [vmem:[#allocation4 + $0x8] sm:$0xf] %vm988, 0.0
      %v1722 = vcombine.low %v1716, %v1717
      %1723 = vrot.lane.b32.xlu0 %v1722, 17
      %v1724 = vpop.permute.xlu0 %1723
      %v1725 = vrot.slane %v1724, 4
      %vm1726 = vcmask 138240
      %v1727 = vsel %vm1726, %v1725, %v1724
      %vm1730 = vcmask 1047556
      %vm1731 = vmor %vm1730, %vm988
      %1732 = vst.msk [vmem:[#allocation4] sm:$0xff] %vm1731, %v1727
      %1733 = vst.msk [vmem:[#allocation4 + $0x8] sm:$0xf] %vm986, %v1725
      %v1734 = vld [vmem:[#allocation4] sm:$0xff]
      %v1735 = vmul.f32 %v1734, %v1249
      %v1737 = vcombine.high %v1735, %v1735
      %1739 = vst [vmem:[#allocation5] sm:$0xf] %v1735
      %1740 = vst [vmem:[#allocation5 + $0x8] sm:$0xf] %v1737
      %v1741 = vld [vmem:[#allocation4] sm:$0xff]
      %v1742 = vld [vmem:[#allocation4 + $0x8] sm:$0xf]
      %v1745 = vcombine.low %v1741, %v1741
      %v1746 = vcombine.low %v1742, %v1742
      %1747 = vrot.lane.b32.xlu0 %v1745, 127
      %v1748 = vpop.permute.xlu0 %1747
      %1749 = vrot.lane.b32.xlu0 %v1741, 127
      %v1750 = vpop.permute.xlu0 %1749
      %1751 = vrot.lane.b32.xlu0 %v1746, 127
      %v1752 = vpop.permute.xlu0 %1751
      %v1753 = vsel %vm1276, %v1748, %v1750
      %v1754 = vsel %vm1276, %v1750, %v1752
      %1757 = vst [vmem:[#allocation5] sm:$0xf0] %v1753
      %1758 = vst [vmem:[#allocation5 + $0x8] sm:$0xf0] %v1754
      %v1759 = vld [vmem:[#allocation4] sm:$0xff]
      %v1760 = vld [vmem:[#allocation4 + $0x8] sm:$0xf]
      %v1761 = vmul.f32 %v1759, %v1317
      %v1762 = vmul.f32 %v1760, %v1315
      %v1765 = vcombine.high %v1761, %v1761
      %1766 = vrot.lane.b32.xlu0 %v1761, 126
      %v1767 = vpop.permute.xlu0 %1766
      %1768 = vrot.lane.b32.xlu0 %v1765, 126
      %v1769 = vpop.permute.xlu0 %1768
      %1770 = vrot.lane.b32.xlu0 %v1762, 126
      %v1771 = vpop.permute.xlu0 %1770
      %v1772 = vsel %vm1333, %v1767, %v1769
      %v1773 = vsel %vm1333, %v1769, %v1771
      %1776 = vst [vmem:[#allocation5 + $0x10] sm:$0xf] %v1772
      %1777 = vst [vmem:[#allocation5 + $0x18] sm:$0xf] %v1773
      %v1778 = vld [vmem:[#allocation4] sm:$0xff]
      %v1779 = vld [vmem:[#allocation4 + $0x8] sm:$0xf]
      %v1780 = vmul.f32 %v1778, %v1364
      %v1781 = vmul.f32 %v1779, %v1362
      %v1784 = vcombine.low %v1780, %v1780
      %v1785 = vcombine.low %v1781, %v1781
      %1786 = vrot.lane.b32.xlu0 %v1784, 112
      %v1787 = vpop.permute.xlu0 %1786
      %1788 = vrot.lane.b32.xlu0 %v1780, 112
      %v1789 = vpop.permute.xlu0 %1788
      %1790 = vrot.lane.b32.xlu0 %v1785, 112
      %v1791 = vpop.permute.xlu0 %1790
      %v1792 = vsel %vm1380, %v1787, %v1789
      %v1793 = vsel %vm1380, %v1789, %v1791
      %1796 = vst [vmem:[#allocation5 + $0x10] sm:$0xf0] %v1792
      %1797 = vst [vmem:[#allocation5 + $0x18] sm:$0xf0] %v1793
      %v1798 = vld [vmem:[#allocation4] sm:$0xff]
      %v1799 = vld [vmem:[#allocation4 + $0x8] sm:$0xf]
      %v1802 = vcombine.high %v1798, %v1798
      %1803 = vrot.lane.b32.xlu0 %v1798, 111
      %v1804 = vpop.permute.xlu0 %1803
      %1805 = vrot.lane.b32.xlu0 %v1802, 111
      %v1806 = vpop.permute.xlu0 %1805
      %1807 = vrot.lane.b32.xlu0 %v1799, 111
      %v1808 = vpop.permute.xlu0 %1807
      %v1809 = vsel %vm1416, %v1804, %v1806
      %v1810 = vsel %vm1416, %v1806, %v1808
      %1813 = vst [vmem:[#allocation5 + $0x20] sm:$0xf] %v1809
      %1814 = vst [vmem:[#allocation5 + $0x28] sm:$0xf] %v1810
      %v1815 = vld [vmem:[#allocation4] sm:$0xff]
      %v1816 = vld [vmem:[#allocation4 + $0x8] sm:$0xf]
      %v1817 = vmul.f32 %v1815, %v1447
      %v1818 = vmul.f32 %v1816, %v1445
      %v1821 = vcombine.low %v1817, %v1817
      %v1822 = vcombine.low %v1818, %v1818
      %1823 = vrot.lane.b32.xlu0 %v1821, 110
      %v1824 = vpop.permute.xlu0 %1823
      %1825 = vrot.lane.b32.xlu0 %v1817, 110
      %v1826 = vpop.permute.xlu0 %1825
      %1827 = vrot.lane.b32.xlu0 %v1822, 110
      %v1828 = vpop.permute.xlu0 %1827
      %v1829 = vsel %vm1463, %v1824, %v1826
      %v1830 = vsel %vm1463, %v1826, %v1828
      %1833 = vst [vmem:[#allocation5 + $0x20] sm:$0xf0] %v1829
      %1834 = vst [vmem:[#allocation5 + $0x28] sm:$0xf0] %v1830
      %v1835 = vld [vmem:[#allocation4] sm:$0xff]
      %v1836 = vld [vmem:[#allocation4 + $0x8] sm:$0xf]
      %v1837 = vmul.f32 %v1835, %v1494
      %v1838 = vmul.f32 %v1836, %v1492
      %v1841 = vcombine.high %v1837, %v1837
      %1842 = vrot.lane.b32.xlu0 %v1837, 96
      %v1843 = vpop.permute.xlu0 %1842
      %1844 = vrot.lane.b32.xlu0 %v1841, 96
      %v1845 = vpop.permute.xlu0 %1844
      %1846 = vrot.lane.b32.xlu0 %v1838, 96
      %v1847 = vpop.permute.xlu0 %1846
      %v1848 = vsel %vm1510, %v1843, %v1845
      %v1849 = vsel %vm1510, %v1845, %v1847
      %1852 = vst [vmem:[#allocation5 + $0x30] sm:$0xf] %v1848
      %1853 = vst [vmem:[#allocation5 + $0x38] sm:$0xf] %v1849
      %v1854 = vld [vmem:[#allocation4] sm:$0xff]
      %v1855 = vld [vmem:[#allocation4 + $0x8] sm:$0xf]
      %v1858 = vcombine.low %v1854, %v1854
      %v1859 = vcombine.low %v1855, %v1855
      %1860 = vrot.lane.b32.xlu0 %v1858, 95
      %v1861 = vpop.permute.xlu0 %1860
      %1862 = vrot.lane.b32.xlu0 %v1854, 95
      %v1863 = vpop.permute.xlu0 %1862
      %1864 = vrot.lane.b32.xlu0 %v1859, 95
      %v1865 = vpop.permute.xlu0 %1864
      %v1866 = vsel %vm1546, %v1861, %v1863
      %v1867 = vsel %vm1546, %v1863, %v1865
      %1870 = vst [vmem:[#allocation5 + $0x30] sm:$0xf0] %v1866
      %1871 = vst [vmem:[#allocation5 + $0x38] sm:$0xf0] %v1867
      %v1872 = vld [vmem:[#allocation4] sm:$0xff]
      %v1873 = vld [vmem:[#allocation4 + $0x8] sm:$0xf]
      %v1874 = vmul.f32 %v1872, %v1577
      %v1875 = vmul.f32 %v1873, %v1575
      %v1878 = vcombine.high %v1874, %v1874
      %1879 = vrot.lane.b32.xlu0 %v1874, 94
      %v1880 = vpop.permute.xlu0 %1879
      %1881 = vrot.lane.b32.xlu0 %v1878, 94
      %v1882 = vpop.permute.xlu0 %1881
      %1883 = vrot.lane.b32.xlu0 %v1875, 94
      %v1884 = vpop.permute.xlu0 %1883
      %v1885 = vsel %vm1593, %v1880, %v1882
      %v1886 = vsel %vm1593, %v1882, %v1884
      %1889 = vst [vmem:[#allocation5 + $0x40] sm:$0xf] %v1885
      %1890 = vst [vmem:[#allocation5 + $0x48] sm:$0xf] %v1886
      %v1891 = vld [vmem:[%s6] sm:$0xf]
      %v1892 = vld [vmem:[#allocation5] sm:$0xff]
      %v1893 = vld [vmem:[#allocation5 + $0x8] sm:$0xff]
      %v1894 = vld [vmem:[#allocation5 + $0x10] sm:$0xff]
      %v1895 = vld [vmem:[#allocation5 + $0x18] sm:$0xff]
      %v1896 = vld [vmem:[#allocation5 + $0x20] sm:$0xff]
      %v1897 = vld [vmem:[#allocation5 + $0x28] sm:$0xff]
      %v1898 = vld [vmem:[#allocation5 + $0x30] sm:$0xff]
      %v1899 = vld [vmem:[#allocation5 + $0x38] sm:$0xff]
      %v1900 = vld [vmem:[#allocation5 + $0x40] sm:$0xf]
      %v1901 = vld [vmem:[#allocation5 + $0x48] sm:$0xf]
      %v1902 = vld [vmem:[%s7] sm:$0xf]
      %1904 = vset.pattern.permute.xlu0 0
      %1905 = vperm.xlu0 %1904, %v1902
      %v1906 = vpop.permute.xlu0 %1905
      %vm1908 = vcmask 293888
      %v1910 = vsel %vm1908, %v1891, 0
      %vm1912 = vcmask 1043456
      %v1914 = vsel %vm1912, %v1900, 0
      %v1917 = vsel %vm1912, %v1901, 0
      %1919 = vmatprep.subr.mxu0 %v1893
      %1920 = vmatpush1.msra.mxu0 %v1892
      %1921 = vmatprep.subr.mxu0 %v1895
      %1922 = vmatpush1.msra.mxu0 %v1894
      %1923 = vmatprep.subr.mxu0 %v1897
      %1924 = vmatpush1.msra.mxu0 %v1896
      %1925 = vmatprep.subr.mxu0 %v1899
      %1926 = vmatpush1.msra.mxu0 %v1898
      %1927 = vmatprep.subr.mxu0 %v1917
      %1928 = vmatpush1.msra.mxu0 %v1914
      %1929 = vmatprep.subr.mxu0 0.0
      %1930 = vmatpush1.msra.mxu0 0.0
      %1931 = vmatprep.subr.mxu0 0.0
      %1932 = vmatpush1.msra.mxu0 0.0
      %1933 = vmatprep.subr.mxu0 0.0
      %1934 = vmatpush1.msra.mxu0 0.0
      %1935 = vmatprep.subr.mxu0 0.0
      %1936 = vmatpush1.msra.mxu0 0.0
      %1937 = vmatprep.subr.mxu0 0.0
      %1938 = vmatpush1.msra.mxu0 0.0
      %1939 = vmatprep.subr.mxu0 0.0
      %1940 = vmatpush1.msra.mxu0 0.0
      %1941 = vmatprep.subr.mxu0 0.0
      %1942 = vmatpush1.msra.mxu0 0.0
      %1943 = vmatprep.subr.mxu0 0.0
      %1944 = vmatpush1.msra.mxu0 0.0
      %1945 = vmatprep.subr.mxu0 0.0
      %1946 = vmatpush1.msra.mxu0 0.0
      %1947 = vmatprep.subr.mxu0 0.0
      %1948 = vmatpush1.msra.mxu0 0.0
      %1949 = vmatprep.subr.mxu0 0.0
      %1950 = vmatpush1.msra.mxu0 0.0
      %1951 = vmatprep.subr.mxu0 0.0
      %1952 = vmatpush1.msra.mxu0 0.0
      %1953 = vmatprep.subr.mxu0 0.0
      %1954 = vmatpush1.msra.mxu0 0.0
      %1955 = vmatprep.subr.mxu0 0.0
      %1956 = vmatpush1.msra.mxu0 0.0
      %1957 = vmatprep.subr.mxu0 0.0
      %1958 = vmatpush1.msra.mxu0 0.0
      %1959 = vmatprep.subr.mxu0 0.0
      %1960 = vmatpush1.msra.mxu0 0.0
      %1961 = vmatprep.subr.mxu0 0.0
      %1962 = vmatpush1.msra.mxu0 0.0
      %1963 = vmatprep.subr.mxu0 0.0
      %1964 = vmatpush1.msra.mxu0 0.0
      %1965 = vmatprep.subr.mxu0 0.0
      %1966 = vmatpush1.msra.mxu0 0.0
      %1967 = vmatprep.subr.mxu0 0.0
      %1968 = vmatpush1.msra.mxu0 0.0
      %1969 = vmatprep.subr.mxu0 0.0
      %1970 = vmatpush1.msra.mxu0 0.0
      %1971 = vmatprep.subr.mxu0 0.0
      %1972 = vmatpush1.msra.mxu0 0.0
      %1973 = vmatprep.subr.mxu0 0.0
      %1974 = vmatpush1.msra.mxu0 0.0
      %1975 = vmatprep.subr.mxu0 0.0
      %1976 = vmatpush1.msra.mxu0 0.0
      %1977 = vmatprep.subr.mxu0 0.0
      %1978 = vmatpush1.msra.mxu0 0.0
      %1979 = vmatprep.subr.mxu0 0.0
      %1980 = vmatpush1.msra.mxu0 0.0
      %1981 = vmatprep.subr.mxu0 0.0
      %1982 = vmatpush1.msra.mxu0 0.0
      %1983 = vmatprep.mubr.f32.mxu0 0.0
      %1984 = vmatmul.mubr.f32.gmra.mrb[0].mxu0 %v1910
      %v1985 = vpop.f32.mrb[0].mxu0
      %v1986 = vadd.f32 %v1906, %v1985
      %v1987 = vpop.f32.mrb[0].mxu0
      %v1988 = vadd.f32 %v1906, %v1987
      %1989 = vdwg.mxu0
      %v1990 = vmax.f32 %v1986, 0.0
      %v1991 = vmax.f32 %v1988, 0.0
      %v1994 = vcombine.low %v1990, %v1991
      %1996 = vst [vmem:[%s352] sm:$0xff] %v1994
      %p1997 = scmp.lt.s32.totalorder %s20, 1
      %s1998 = scalar_select %p1997, %s20, 1
      %s1999 = smul.addr %s1998, 2
      %s2000 = smul.addr %s1999, 4
      %s2001 = scalar_lea.vmem %s9, %s2000
      // Predicated region
      $region57: #{up_bottle_forward.1} parent=55 // pred_check
        %p2002 = pneg %p237
      $region58: #{up_bottle_forward.1} parent=55 // pred_check_branch
        %2004 = sbr.rel (%p2002) target = $region60
      $region59: #{up_bottle_forward.1} parent=55 // pred_region
        _
      $region60: #{up_bottle_forward.1} parent=55 // pred_fallthru
        _
    $region56: #{up_bottle_forward.1} parent=5 // pred_fallthru
      _
    %p2005 = scmp.le.s32.totalorder 2, %s15
    // Predicated region
    $region61: #{up_bottle_forward.1} parent=5 // pred_check
      %p2006 = pneg %p2005
    $region62: #{up_bottle_forward.1} parent=5 // pred_check_branch
      %2008 = sbr.rel (%p2006) target = $region64
    $region63: #{up_bottle_forward.1} parent=5 // pred_region
      %s2009 = ssub.s32 %s15, 2
      // Predicated region
      $region65: #{up_bottle_forward.1} parent=63 // pred_check
        %p2010 = pneg %p243
      $region66: #{up_bottle_forward.1} parent=63 // pred_check_branch
        %2012 = sbr.rel (%p2010) target = $region68
      $region67: #{up_bottle_forward.1} parent=63 // pred_region
        %p2013 = scmp.lt.s32.totalorder %s21, 1
        %s2014 = scalar_select %p2013, %s21, 1
        %s2015 = smul.addr %s2014, 2
        %s2016 = smul.addr %s2015, 4
        %s2017 = scalar_lea.vmem %s9, %s2016
      $region68: #{up_bottle_forward.1} parent=63 // pred_fallthru
        _
    $region64: #{up_bottle_forward.1} parent=5 // pred_fallthru
      _
  $region6: #{up_bottle_forward.1} parent=0 // loop_footer
    %s19 = sadd.s32 1, %s15
  $region7: #{up_bottle_forward.1} parent=0 // loop_footer_branch
    %14 = sbr.rel target = $region3
  $region8: #{up_bottle_forward.1} parent=0 // loop_exit
    _

</llo_original>
